<compile_context>
chip_gen: v6e
topology: v6e:2x2x1
jax: 0.10.0
libtpu: 0.0.40
codegen_flags: <defaults>
</compile_context>

<pallas_src>
import functools

import jax
import jax.numpy as jnp
from jax.experimental import pallas as pl
from jax.experimental.pallas import tpu as pltpu

FOCAL_ALPHA = 0.25
FOCAL_GAMMA = 2.0          # module default; kernel hard-codes the square
_PAD_VALUE = -1e30         # softplus(x) * sigmoid(x)^2 == 0 at this value


def _round_up(x, m):
    return ((x + m - 1) // m) * m


def _cdiv(a, b):
    return (a + b - 1) // b


# --------------------------------------------------------------------------
# Kernel: per-tile all-negative focal partial sum + per-image non-empty count.
# Block = (B, TQ, Cpad), grid = (num_q_tiles,).
# --------------------------------------------------------------------------
def _class_kernel(logits_ref, focal_ref, card_ref, *, num_classes):
    x = logits_ref[...].astype(jnp.float32)            # (B, TQ, Cp) lane-dense
    nb = x.shape[0]

    # All-negative sigmoid focal loss (gamma == 2), WITHOUT the (1 - alpha)
    # factor (applied once on the host-side sum):  softplus(x) * sigmoid(x)^2.
    # Padded entries (x == -1e30) contribute exactly 0, so no masking needed.
    e = jnp.exp(-jnp.abs(x))                            # exp(-|x|)
    softplus = jnp.maximum(x, 0.0) + jnp.log1p(e)       # stable softplus(x)
    inv = pl.reciprocal(1.0 + e, approx=True)           # ~ 1 / (1 + e)  (EUP)
    prob = jnp.where(x >= 0, inv, 1.0 - inv)            # sigmoid(x)
    loss = softplus * prob * prob
    focal_ref[...] = jnp.sum(loss).reshape(1, 1, 1)

    # Cardinality: argmax != last class  <=>  max over [0, C-2] >= x[..., C-1]
    # (iota-masked reduces; padded class lanes sit at -1e30 and never win;
    #  fully padded rows count as non-empty and are subtracted outside).
    lane = jax.lax.broadcasted_iota(jnp.int32, x.shape, 2)
    is_last = lane == (num_classes - 1)
    neg = jnp.float32(-3.0e38)
    last_val = jnp.max(jnp.where(is_last, x, neg), axis=-1)      # (B, TQ)
    max_rest = jnp.max(jnp.where(is_last, neg, x), axis=-1)      # (B, TQ)
    not_empty = jnp.where(max_rest >= last_val, 1.0, 0.0)        # (B, TQ) f32
    counts = jnp.sum(not_empty, axis=1, keepdims=True)           # (B, 1)
    # lane-dense (unmasked) store of the per-image partial counts
    card_ref[...] = jnp.broadcast_to(counts.reshape(1, nb, 1), (1, nb, 128))


def class_losses(logits, *, block_bytes_target=4 << 20):
    """Returns (sum over all elements of softplus(x)*sigmoid(x)^2,
                per-image count of queries whose argmax != last class)."""
    B, Q, C = logits.shape
    itemsize = jnp.dtype(logits.dtype).itemsize
    cp = _round_up(C, 128)                 # lane-dense class axis
    qp = _round_up(Q, 16)                  # multiple of 16 -> bf16-safe sublanes

    # Query tile: as large as the per-block VMEM budget allows, but keep at
    # least 2 grid steps so both v7x TensorCores get work.
    row_bytes = B * cp * itemsize
    tq = max(16, (block_bytes_target // row_bytes) // 16 * 16)
    if qp >= 32:
        tq = min(tq, _round_up(_cdiv(qp, 2), 16))
    tq = min(tq, qp)
    nq = _cdiv(qp, tq)
    qpad = nq * tq

    x = logits
    if (qpad, cp) != (Q, C):
        # Very negative padding: focal contribution is exactly 0 and padded
        # class lanes can never become the argmax.
        x = jnp.pad(x, ((0, 0), (0, qpad - Q), (0, cp - C)),
                    constant_values=_PAD_VALUE)

    kernel = functools.partial(_class_kernel, num_classes=C)

    # Explicit VMEM budget: double-buffered logits blocks + slack; portable
    # across v5e/v6e/v7x scoped-VMEM defaults (cap well under 32 MiB).
    block_bytes = B * tq * cp * itemsize
    vmem_limit = int(min(max(4 * block_bytes + (2 << 20), 8 << 20), 32 << 20))

    focal_part, card_part = pl.pallas_call(
        kernel,
        grid=(nq,),
        out_shape=(
            jax.ShapeDtypeStruct((nq, 1, 1), jnp.float32),
            jax.ShapeDtypeStruct((nq, B, 128), jnp.float32),
        ),
        in_specs=[pl.BlockSpec((B, tq, cp), lambda q: (0, q, 0))],
        out_specs=(
            pl.BlockSpec((1, 1, 1), lambda q: (q, 0, 0)),
            pl.BlockSpec((1, B, 128), lambda q: (q, 0, 0)),
        ),
        compiler_params=pltpu.CompilerParams(
            dimension_semantics=("parallel",),
            vmem_limit_bytes=vmem_limit),
    )(x)

    neg_unit_sum = jnp.sum(focal_part)
    # padded query rows are all -1e30 -> each counted once; subtract them.
    card_pred = jnp.sum(card_part[:, :, 0], axis=0) - float(qpad - Q)   # (B,)
    return neg_unit_sum, card_pred


# --------------------------------------------------------------------------
# Matched-box losses (L1 sum on cxcywh + sum of 1 - GIoU) — plain JAX.
# --------------------------------------------------------------------------
def _box_losses(src_boxes, tgt_boxes, eps=1e-7):
    l1 = jnp.sum(jnp.abs(src_boxes - tgt_boxes))

    def xyxy(b):
        cx, cy, w, h = b[:, 0], b[:, 1], b[:, 2], b[:, 3]
        return cx - 0.5 * w, cy - 0.5 * h, cx + 0.5 * w, cy + 0.5 * h

    sx0, sy0, sx1, sy1 = xyxy(src_boxes)
    tx0, ty0, tx1, ty1 = xyxy(tgt_boxes)
    area_s = (sx1 - sx0) * (sy1 - sy0)
    area_t = (tx1 - tx0) * (ty1 - ty0)

    ix0 = jnp.maximum(sx0, tx0)
    iy0 = jnp.maximum(sy0, ty0)
    ix1 = jnp.minimum(sx1, tx1)
    iy1 = jnp.minimum(sy1, ty1)
    inter = jnp.clip(ix1 - ix0, 0.0) * jnp.clip(iy1 - iy0, 0.0)
    union = area_s + area_t - inter
    iou = inter / (union + eps)

    ex0 = jnp.minimum(sx0, tx0)
    ey0 = jnp.minimum(sy0, ty0)
    ex1 = jnp.maximum(sx1, tx1)
    ey1 = jnp.maximum(sy1, ty1)
    area_e = jnp.clip(ex1 - ex0, 0.0) * jnp.clip(ey1 - ey0, 0.0)
    giou = iou - (area_e - union) / (area_e + eps)
    return l1, jnp.sum(1.0 - giou)


# --------------------------------------------------------------------------
# SetCriterion.forward equivalent (losses = ['labels','cardinality','boxes'],
# no aux/enc outputs, bh=False).
# --------------------------------------------------------------------------
def set_criterion_forward(pred_logits, pred_boxes, tgt_labels, tgt_boxes):
    B, Q, C = pred_logits.shape
    T = tgt_labels.shape[1]

    # TODO(synk): Hungarian matching replaced by a fixed deterministic
    # assignment: query j of image b matches target j of image b.
    tgt_idx = jnp.tile(jnp.arange(T, dtype=jnp.int32), (B, 1))        # (B, T)
    src_idx = tgt_idx

    num_boxes = float(max(B * T, 1))                                  # clamp(min=1)
    batch_arange = jnp.repeat(jnp.arange(B), T)                       # (B*T,)
    flat_src = src_idx.reshape(-1)

    # ---- loss_labels -------------------------------------------------------
    # target class per query: 0 (module's torch.full(..., 0)) except matched.
    target_classes_o = jax.vmap(lambda l, i: l[i])(tgt_labels, tgt_idx).reshape(-1)
    target_classes = jnp.zeros((B, Q), jnp.int32).at[batch_arange, flat_src].set(
        target_classes_o.astype(jnp.int32))

    # Pallas kernel: all-negative focal partial sum + per-image cardinality.
    neg_unit_sum, card_pred = class_losses(pred_logits)

    # Exact correction at each query's single positive class (B*Q scalars):
    # replace (1-a)*softplus(x)*sig(x)^2 by a*softplus(-x)*sig(-x)^2 there.
    x_tc = jnp.take_along_axis(pred_logits, target_classes[..., None], axis=2)[..., 0]
    p_tc = jax.nn.sigmoid(x_tc)
    pos_term = FOCAL_ALPHA * jax.nn.softplus(-x_tc) * (1.0 - p_tc) ** 2
    neg_term = (1.0 - FOCAL_ALPHA) * jax.nn.softplus(x_tc) * p_tc ** 2
    focal_sum = (1.0 - FOCAL_ALPHA) * neg_unit_sum + jnp.sum(pos_term - neg_term)
    # focal_loss() = elem_sum / Q / num_boxes ; loss_labels multiplies by Q.
    loss_ce = focal_sum / num_boxes

    # class_error (logging metric — tiny gather, plain JAX)
    matched_logits = pred_logits[batch_arange, flat_src]              # (B*T, C)
    acc = jnp.mean(
        (jnp.argmax(matched_logits, axis=-1) == target_classes_o).astype(jnp.float32)
    ) * 100.0
    class_error = 100.0 - acc

    # ---- loss_cardinality ---------------------------------------------------
    tgt_lengths = jnp.full((B,), float(T), jnp.float32)
    cardinality_error = jnp.mean(jnp.abs(card_pred - tgt_lengths))

    # ---- loss_boxes ---------------------------------------------------------
    src_boxes = pred_boxes[batch_arange, flat_src]                    # (B*T, 4)
    target_boxes = jax.vmap(lambda b, i: b[i])(tgt_boxes, tgt_idx).reshape(-1, 4)
    l1_sum, giou_sum = _box_losses(src_boxes, target_boxes)
    loss_bbox = l1_sum / num_boxes
    loss_giou = giou_sum / num_boxes

    return {
        "loss_ce": loss_ce,
        "class_error": class_error,
        "cardinality_error": cardinality_error,
        "loss_bbox": loss_bbox,
        "loss_giou": loss_giou,
    }


# --------------------------------------------------------------------------
# Pure-JAX reference (same math, exact sigmoid / divide) — sanity check.
# --------------------------------------------------------------------------
def _reference(pred_logits, pred_boxes, tgt_labels, tgt_boxes):
    B, Q, C = pred_logits.shape
    T = tgt_labels.shape[1]
    num_boxes = float(max(B * T, 1))
    batch_arange = jnp.repeat(jnp.arange(B), T)
    flat_src = jnp.tile(jnp.arange(T), (B,))

    target_classes_o = tgt_labels.reshape(-1)
    target_classes = jnp.zeros((B, Q), jnp.int32).at[batch_arange, flat_src].set(
        target_classes_o)
    t = jax.nn.one_hot(target_classes, C, dtype=jnp.float32)
    x = pred_logits
    prob = jax.nn.sigmoid(x)
    ce = jnp.maximum(x, 0.0) - x * t + jnp.log1p(jnp.exp(-jnp.abs(x)))
    p_t = prob * t + (1 - prob) * (1 - t)
    loss = (FOCAL_ALPHA * t * ce * (1 - p_t) ** 2
            + (1 - FOCAL_ALPHA) * (1 - t) * ce * (1 - p_t) ** 2)
    loss_ce = jnp.sum(loss) / num_boxes

    card_pred = jnp.sum(jnp.argmax(x, -1) != C - 1, axis=1).astype(jnp.float32)
    card_err = jnp.mean(jnp.abs(card_pred - float(T)))

    s = pred_boxes[batch_arange, flat_src]
    tb = tgt_boxes.reshape(-1, 4)
    loss_bbox = jnp.sum(jnp.abs(s - tb)) / num_boxes

    def xyxy(b):
        return jnp.stack([b[:, 0] - b[:, 2] / 2, b[:, 1] - b[:, 3] / 2,
                          b[:, 0] + b[:, 2] / 2, b[:, 1] + b[:, 3] / 2], -1)
    a, b2 = xyxy(s), xyxy(tb)
    area1 = (a[:, 2] - a[:, 0]) * (a[:, 3] - a[:, 1])
    area2 = (b2[:, 2] - b2[:, 0]) * (b2[:, 3] - b2[:, 1])
    lt = jnp.maximum(a[:, :2], b2[:, :2]); rb = jnp.minimum(a[:, 2:], b2[:, 2:])
    wh = jnp.clip(rb - lt, 0); inter = wh[:, 0] * wh[:, 1]
    union = area1 + area2 - inter; iou = inter / union
    ltc = jnp.minimum(a[:, :2], b2[:, :2]); rbc = jnp.maximum(a[:, 2:], b2[:, 2:])
    whc = jnp.clip(rbc - ltc, 0); areac = whc[:, 0] * whc[:, 1]
    giou = iou - (areac - union) / areac
    loss_giou = jnp.sum(1 - giou) / num_boxes
    return loss_ce, card_err, loss_bbox, loss_giou


if __name__ == "__main__":
    forward = jax.jit(set_criterion_forward)

    # (a) canonical DETR-ish C=91 with row + lane padding; (b) larger Q.
    configs = [
        (2, 300, 91, 6),   # B, Q, C, T
        (2, 600, 91, 4),
    ]
    for cfg_i, (B, Q, C, T) in enumerate(configs):
        key = jax.random.PRNGKey(0)
        k1, k2, k3, k4 = jax.random.split(key, 4)

        pred_logits = jax.random.normal(k1, (B, Q, C), jnp.float32)
        pred_boxes = jax.nn.sigmoid(jax.random.normal(k2, (B, Q, 4), jnp.float32))
        tgt_labels = jax.random.randint(k3, (B, T), 1, C)                 # 1..C-1
        tgt_boxes = (jax.nn.sigmoid(jax.random.normal(k4, (B, T, 4), jnp.float32))
                     * 0.5 + 0.25)

        losses = forward(pred_logits, pred_boxes, tgt_labels, tgt_boxes)
        losses = jax.block_until_ready(losses)

        ref_ce, ref_card, ref_bbox, ref_giou = _reference(
            pred_logits, pred_boxes, tgt_labels, tgt_boxes)
        assert jnp.allclose(losses["loss_ce"], ref_ce, rtol=1e-2, atol=1e-3), cfg_i
        assert jnp.allclose(losses["cardinality_error"], ref_card,
                            rtol=1e-2, atol=1e-3), cfg_i
        assert jnp.allclose(losses["loss_bbox"], ref_bbox, rtol=1e-2, atol=1e-3), cfg_i
        assert jnp.allclose(losses["loss_giou"], ref_giou, rtol=1e-2, atol=1e-3), cfg_i

    print("KERNEL_OK")
</pallas_src>

<mosaic_0001>
module attributes {stable_mosaic.version = 11 : i64} {
  func.func @_class_kernel(%arg0: i32, %arg1: memref<2x160x128xf32, #tpu.memory_space<vmem>>, %arg2: memref<1x1x1xf32, #tpu.memory_space<vmem>>, %arg3: memref<1x2x128xf32, #tpu.memory_space<vmem>>) attributes {dimension_semantics = [#tpu.dimension_semantics<parallel>], iteration_bounds = array<i64: 2>, scalar_prefetch = 0 : i64, scratch_operands = 0 : i64, tpu.core_type = #tpu.core_type<tc>, window_params = [{transform_indices = @transform_0, window_bounds = array<i64: 2, 160, 128>}, {transform_indices = @transform_1, window_bounds = array<i64: 1, 1, 1>}, {transform_indices = @transform_2, window_bounds = array<i64: 1, 2, 128>}]} {
    %c0 = arith.constant 0 : index
    %c0_0 = arith.constant 0 : index
    %c0_1 = arith.constant 0 : index
    %0 = vector.load %arg1[%c0, %c0_0, %c0_1] : memref<2x160x128xf32, #tpu.memory_space<vmem>>, vector<2x160x128xf32>
    %1 = math.absf %0 : vector<2x160x128xf32>
    %cst = arith.constant 0.000000e+00 : f32
    %2 = vector.broadcast %cst : f32 to vector<2x160x128xf32>
    %3 = arith.subf %2, %1 : vector<2x160x128xf32>
    %4 = math.exp %3 : vector<2x160x128xf32>
    %cst_2 = arith.constant 0.000000e+00 : f32
    %5 = vector.broadcast %cst_2 : f32 to vector<2x160x128xf32>
    %6 = arith.maximumf %0, %5 : vector<2x160x128xf32>
    %7 = math.log1p %4 : vector<2x160x128xf32>
    %8 = arith.addf %6, %7 : vector<2x160x128xf32>
    %cst_3 = arith.constant 1.000000e+00 : f32
    %9 = vector.broadcast %cst_3 : f32 to vector<2x160x128xf32>
    %10 = arith.addf %9, %4 : vector<2x160x128xf32>
    %11 = tpu.reciprocal %10 {approx = true} : vector<2x160x128xf32> -> vector<2x160x128xf32>
    %cst_4 = arith.constant 0.000000e+00 : f32
    %12 = vector.broadcast %cst_4 : f32 to vector<2x160x128xf32>
    %13 = arith.cmpf oge, %0, %12 : vector<2x160x128xf32>
    %cst_5 = arith.constant 1.000000e+00 : f32
    %14 = vector.broadcast %cst_5 : f32 to vector<2x160x128xf32>
    %15 = arith.subf %14, %11 : vector<2x160x128xf32>
    %16 = arith.select %13, %11, %15 : vector<2x160x128xi1>, vector<2x160x128xf32>
    %17 = arith.mulf %8, %16 : vector<2x160x128xf32>
    %18 = arith.mulf %17, %16 : vector<2x160x128xf32>
    %19 = vector.shape_cast %18 : vector<2x160x128xf32> to vector<1x2x160x128xf32>
    %cst_6 = arith.constant dense<0.000000e+00> : vector<1xf32>
    %20 = vector.multi_reduction <add>, %19, %cst_6 [1, 2, 3] : vector<1x2x160x128xf32> to vector<1xf32>
    %21 = vector.shape_cast %20 : vector<1xf32> to vector<1x1x1x1xf32>
    %22 = vector.extract %21[0, 0, 0, 0] : f32 from vector<1x1x1x1xf32>
    %23 = vector.broadcast %22 : f32 to vector<1x1x1xf32>
    %c0_7 = arith.constant 0 : index
    %c0_8 = arith.constant 0 : index
    %c0_9 = arith.constant 0 : index
    %24 = vector.load %arg2[%c0_7, %c0_8, %c0_9] : memref<1x1x1xf32, #tpu.memory_space<vmem>>, vector<1x1x1xf32>
    tpu.vector_store %arg2[%c0_7, %c0_8, %c0_9], %23 {strides = array<i32>} : memref<1x1x1xf32, #tpu.memory_space<vmem>>, vector<1x1x1xf32>,
    %25 = tpu.iota {dimensions = array<i32: 2>} : vector<2x160x128xi32>
    %c90_i32 = arith.constant 90 : i32
    %26 = vector.broadcast %c90_i32 : i32 to vector<2x160x128xi32>
    %27 = arith.cmpi eq, %25, %26 : vector<2x160x128xi32>
    %cst_10 = arith.constant -3.000000e+38 : f32
    %28 = vector.broadcast %cst_10 : f32 to vector<2x160x128xf32>
    %29 = arith.select %27, %0, %28 : vector<2x160x128xi1>, vector<2x160x128xf32>
    %cst_11 = arith.constant dense<0xFF800000> : vector<2x160xf32>
    %30 = vector.multi_reduction <maximumf>, %29, %cst_11 [2] : vector<2x160x128xf32> to vector<2x160xf32>
    %cst_12 = arith.constant -3.000000e+38 : f32
    %31 = vector.broadcast %cst_12 : f32 to vector<2x160x128xf32>
    %32 = arith.select %27, %31, %0 : vector<2x160x128xi1>, vector<2x160x128xf32>
    %cst_13 = arith.constant dense<0xFF800000> : vector<2x160xf32>
    %33 = vector.multi_reduction <maximumf>, %32, %cst_13 [2] : vector<2x160x128xf32> to vector<2x160xf32>
    %34 = arith.cmpf oge, %33, %30 : vector<2x160xf32>
    %cst_14 = arith.constant 1.000000e+00 : f32
    %cst_15 = arith.constant 0.000000e+00 : f32
    %35 = vector.broadcast %cst_14 : f32 to vector<2x160xf32>
    %36 = vector.broadcast %cst_15 : f32 to vector<2x160xf32>
    %37 = arith.select %34, %35, %36 : vector<2x160xi1>, vector<2x160xf32>
    %cst_16 = arith.constant dense<0.000000e+00> : vector<2xf32>
    %38 = vector.multi_reduction <add>, %37, %cst_16 [1] : vector<2x160xf32> to vector<2xf32>
    %39 = vector.shape_cast %38 : vector<2xf32> to vector<2x1xf32>
    %40 = vector.shape_cast %39 : vector<2x1xf32> to vector<1x2x1xf32>
    %41 = vector.shape_cast %40 : vector<1x2x1xf32> to vector<1x2x1xf32>
    %42 = vector.broadcast %41 : vector<1x2x1xf32> to vector<1x2x128xf32>
    %c0_17 = arith.constant 0 : index
    %c0_18 = arith.constant 0 : index
    %c0_19 = arith.constant 0 : index
    %43 = vector.load %arg3[%c0_17, %c0_18, %c0_19] : memref<1x2x128xf32, #tpu.memory_space<vmem>>, vector<1x2x128xf32>
    tpu.vector_store %arg3[%c0_17, %c0_18, %c0_19], %42 {strides = array<i32>} : memref<1x2x128xf32, #tpu.memory_space<vmem>>, vector<1x2x128xf32>,
    return
  }
  func.func @transform_0(%arg0: i32) -> (i32, i32, i32) {
    %c0_i32 = arith.constant 0 : i32
    %c0_i32_0 = arith.constant 0 : i32
    %c0_i32_1 = arith.constant 0 : i32
    return %c0_i32, %arg0, %c0_i32_0 : i32, i32, i32
  }
  func.func @transform_1(%arg0: i32) -> (i32, i32, i32) {
    %c0_i32 = arith.constant 0 : i32
    %c0_i32_0 = arith.constant 0 : i32
    %c0_i32_1 = arith.constant 0 : i32
    return %arg0, %c0_i32, %c0_i32_0 : i32, i32, i32
  }
  func.func @transform_2(%arg0: i32) -> (i32, i32, i32) {
    %c0_i32 = arith.constant 0 : i32
    %c0_i32_0 = arith.constant 0 : i32
    %c0_i32_1 = arith.constant 0 : i32
    return %arg0, %c0_i32, %c0_i32_0 : i32, i32, i32
  }
}

</mosaic_0001>

<llo_original>
// kernel: set_criterion_forward.1
$region0: #{set_criterion_forward.1}
  #allocation0 [shape = 'u32[]', space=smem, size = 0x4, offset = 0x4, fixed_abs, tag = 'smem constant byte address 0x4 - core index']
  #allocation1 [shape = 'u32[144,128]{1,0:T(1,128)}', space=vmem, size = 0x12000, scoped, tag = 'internal scratch']
  %s0 = inlined_call_operand.vmem [shape: f32[2,320,128], index: 0, kind: input, shape index: {}]
  %s1 = inlined_call_operand.vmem [shape: f32[2,1,1], index: 1, kind: output, shape index: {0}]
  %s2 = inlined_call_operand.vmem [shape: f32[2,2,128], index: 2, kind: output, shape index: {1}]
  %3 = xla_tuple %s1, %s2
  %s4 = sld [smem:[#allocation0]]
  $region83: #{set_criterion_forward.1} parent=0
    _
  %s6 = ssub.s32 1, %s4
  %s7 = scalar_select 0, %s6, %s4
  $region1: #{set_criterion_forward.1} parent=0
    #allocation2 [shape = 'u8[327680]{0}', space=vmem, size = 0x50000, scoped, tag = 'input window, operand 0']
    loop: start=0, step=1, limit=4
    $region2: #{set_criterion_forward.1} parent=1 // loop_pre_header
      _
    $region3: #{set_criterion_forward.1} parent=1 // loop_header
      %s9 = sphi 0, %s13
      %p10 = scmp.ge.s32.totalorder %s9, 4
      %s19 = sphi 0, %s21
      %s22 = sphi 0, %s19
      %s23 = sphi 0, %s22
      %s39 = sphi 0, %s23
      %s45 = sphi 0, %s47
      %s48 = sphi 0, %s45
      %s49 = sphi 0, %s48
      %s65 = sphi 0, %s49
      %s71 = sphi 0, %s73
      %s74 = sphi 0, %s71
      %s75 = sphi 0, %s74
      %s91 = sphi 0, %s75
    $region4: #{set_criterion_forward.1} parent=1 // loop_header_branch
      %12 = sbr.rel (%p10) target = $region8
    $region5: #{set_criterion_forward.1} parent=1 // loop_body
      %s14 = ssub.s32 %s9, 1
      %s15 = ssub.s32 %s9, 2
      %s16 = sadd.s32 %s9, 1
      %s17 = ssub.s32 %s9, %s16
      %p18 = scmp.eq.s32.totalorder %s17, 0
      %s20 = sadd.s32 %s19, 1
      %s21 = scalar_select %p18, %s19, %s20
      %p24 = pneg %p18
      %p25 = scmp.eq.s32.totalorder %s9, 1
      %p26 = por %p24, %p25
      %p27 = scmp.ne.s32.totalorder %s19, %s22
      %p28 = scmp.eq.s32.totalorder %s9, 0
      %p29 = por %p27, %p28
      %p30 = scmp.ne.s32.totalorder %s19, %s22
      %p31 = scmp.eq.s32.totalorder %s14, 1
      %p32 = por %p30, %p31
      %p33 = scmp.ne.s32.totalorder %s22, %s23
      %p34 = scmp.eq.s32.totalorder %s14, 0
      %p35 = por %p33, %p34
      %p36 = scmp.ne.s32.totalorder %s22, %s23
      %p37 = scmp.eq.s32.totalorder %s15, 1
      %p38 = por %p36, %p37
      %p40 = scmp.ne.s32.totalorder %s23, %s39
      %p41 = scmp.eq.s32.totalorder %s15, 0
      %p42 = por %p40, %p41
      %s43 = ssub.s32 %s9, %s16
      %p44 = scmp.eq.s32.totalorder %s43, 0
      %s46 = sadd.s32 %s45, 1
      %s47 = scalar_select %p44, %s45, %s46
      %p50 = pneg %p44
      %p51 = scmp.eq.s32.totalorder %s9, 1
      %p52 = por %p50, %p51
      %p53 = scmp.ne.s32.totalorder %s45, %s48
      %p54 = scmp.eq.s32.totalorder %s9, 0
      %p55 = por %p53, %p54
      %p56 = scmp.ne.s32.totalorder %s45, %s48
      %p57 = scmp.eq.s32.totalorder %s14, 1
      %p58 = por %p56, %p57
      %p59 = scmp.ne.s32.totalorder %s48, %s49
      %p60 = scmp.eq.s32.totalorder %s14, 0
      %p61 = por %p59, %p60
      %p62 = scmp.ne.s32.totalorder %s48, %s49
      %p63 = scmp.eq.s32.totalorder %s15, 1
      %p64 = por %p62, %p63
      %p66 = scmp.ne.s32.totalorder %s49, %s65
      %p67 = scmp.eq.s32.totalorder %s15, 0
      %p68 = por %p66, %p67
      %s69 = ssub.s32 %s9, %s16
      %p70 = scmp.eq.s32.totalorder %s69, 0
      %s72 = sadd.s32 %s71, 1
      %s73 = scalar_select %p70, %s71, %s72
      %p76 = pneg %p70
      %p77 = scmp.eq.s32.totalorder %s9, 1
      %p78 = por %p76, %p77
      %p79 = scmp.ne.s32.totalorder %s71, %s74
      %p80 = scmp.eq.s32.totalorder %s9, 0
      %p81 = por %p79, %p80
      %p82 = scmp.ne.s32.totalorder %s71, %s74
      %p83 = scmp.eq.s32.totalorder %s14, 1
      %p84 = por %p82, %p83
      %p85 = scmp.ne.s32.totalorder %s74, %s75
      %p86 = scmp.eq.s32.totalorder %s14, 0
      %p87 = por %p85, %p86
      %p88 = scmp.ne.s32.totalorder %s74, %s75
      %p89 = scmp.eq.s32.totalorder %s15, 1
      %p90 = por %p88, %p89
      %p92 = scmp.ne.s32.totalorder %s75, %s91
      %p93 = scmp.eq.s32.totalorder %s15, 0
      %p94 = por %p92, %p93
      %p95 = scmp.le.s32.totalorder 1, %s9
      %p96 = scmp.lt.s32.totalorder %s9, 3
      %p97 = pnand %p95, %p96
      %p98 = pneg %p97
      // Predicated region
      $region9: #{set_criterion_forward.1} parent=5 // pred_check
        _
      $region10: #{set_criterion_forward.1} parent=5 // pred_check_branch
        %100 = sbr.rel (%p97) target = $region12
      $region11: #{set_criterion_forward.1} parent=5 // pred_region
        %s101 = ssub.s32 %s9, 1
      $region12: #{set_criterion_forward.1} parent=5 // pred_fallthru
        _
      %p102 = scmp.lt.s32.totalorder %s9, 2
      // Predicated region
      $region13: #{set_criterion_forward.1} parent=5 // pred_check
        %p103 = pneg %p102
      $region14: #{set_criterion_forward.1} parent=5 // pred_check_branch
        %105 = sbr.rel (%p103) target = $region16
      $region15: #{set_criterion_forward.1} parent=5 // pred_region
        // Predicated region
        $region17: #{set_criterion_forward.1} parent=15 // pred_check
          %p106 = pneg %p29
        $region18: #{set_criterion_forward.1} parent=15 // pred_check_branch
          %108 = sbr.rel (%p106) target = $region20
        $region19: #{set_criterion_forward.1} parent=15 // pred_region
          %s109 = sand.u32 %s19, 1
          %s110 = sand.u32 %s19, 1
          %s111 = smul.addr %s110, 320
          %s112 = scalar_lea.vmem [#allocation2], %s111
          %s113 = smul.u32 20, %s9
          %s114 = smul.addr %s113, 8
          %s115 = scalar_lea.vmem %s0, %s114
          // Predicated region
          $region21: #{set_criterion_forward.1} parent=19 // pred_check
            _
          $region22: #{set_criterion_forward.1} parent=19 // pred_check_branch
            %117 = sbr.rel (0) target = $region24
          $region23: #{set_criterion_forward.1} parent=19 // pred_region
            // Predicated region
            $region25: #{set_criterion_forward.1} parent=23 // pred_check
              _
            $region26: #{set_criterion_forward.1} parent=23 // pred_check_branch
              %119 = sbr.rel (0) target = $region28
            $region27: #{set_criterion_forward.1} parent=23 // pred_region
              // Predicated region
              $region40: #{set_criterion_forward.1} parent=27 // pred_check
                _
              $region41: #{set_criterion_forward.1} parent=27 // pred_check_branch
                %213 = sbr.rel (0) target = $region43
              $region42: #{set_criterion_forward.1} parent=27 // pred_region
                loop: start=0, step=1, limit=1
                $region44: #{set_criterion_forward.1} parent=42 // loop_pre_header
                  _
                $region45: #{set_criterion_forward.1} parent=42 // loop_header
                  %s215 = sphi 0, %s219
                  %p216 = scmp.ge.s32.totalorder %s215, 1
                  %s220 = sphi %s115, %s115
                  %s221 = sphi %s112, %s112
                $region46: #{set_criterion_forward.1} parent=42 // loop_header_branch
                  %218 = sbr.rel (%p216) target = $region50
                $region47: #{set_criterion_forward.1} parent=42 // loop_body
                  %v222 = vld [vmem:[%s220] sm:$0xff]
                  %223 = vst [vmem:[%s221] sm:$0xff] %v222
                  %v224 = vld [vmem:[%s220 + $0x8] sm:$0xff]
                  %225 = vst [vmem:[%s221 + $0x8] sm:$0xff] %v224
                  %v226 = vld [vmem:[%s220 + $0x10] sm:$0xff]
                  %227 = vst [vmem:[%s221 + $0x10] sm:$0xff] %v226
                  %v228 = vld [vmem:[%s220 + $0x18] sm:$0xff]
                  %229 = vst [vmem:[%s221 + $0x18] sm:$0xff] %v228
                  %v230 = vld [vmem:[%s220 + $0x20] sm:$0xff]
                  %231 = vst [vmem:[%s221 + $0x20] sm:$0xff] %v230
                  %v232 = vld [vmem:[%s220 + $0x28] sm:$0xff]
                  %233 = vst [vmem:[%s221 + $0x28] sm:$0xff] %v232
                  %v234 = vld [vmem:[%s220 + $0x30] sm:$0xff]
                  %235 = vst [vmem:[%s221 + $0x30] sm:$0xff] %v234
                  %v236 = vld [vmem:[%s220 + $0x38] sm:$0xff]
                  %237 = vst [vmem:[%s221 + $0x38] sm:$0xff] %v236
                  %v238 = vld [vmem:[%s220 + $0x40] sm:$0xff]
                  %239 = vst [vmem:[%s221 + $0x40] sm:$0xff] %v238
                  %v240 = vld [vmem:[%s220 + $0x48] sm:$0xff]
                  %241 = vst [vmem:[%s221 + $0x48] sm:$0xff] %v240
                  %v242 = vld [vmem:[%s220 + $0x50] sm:$0xff]
                  %243 = vst [vmem:[%s221 + $0x50] sm:$0xff] %v242
                  %v244 = vld [vmem:[%s220 + $0x58] sm:$0xff]
                  %245 = vst [vmem:[%s221 + $0x58] sm:$0xff] %v244
                  %v246 = vld [vmem:[%s220 + $0x60] sm:$0xff]
                  %247 = vst [vmem:[%s221 + $0x60] sm:$0xff] %v246
                  %v248 = vld [vmem:[%s220 + $0x68] sm:$0xff]
                  %249 = vst [vmem:[%s221 + $0x68] sm:$0xff] %v248
                  %v250 = vld [vmem:[%s220 + $0x70] sm:$0xff]
                  %251 = vst [vmem:[%s221 + $0x70] sm:$0xff] %v250
                  %v252 = vld [vmem:[%s220 + $0x78] sm:$0xff]
                  %253 = vst [vmem:[%s221 + $0x78] sm:$0xff] %v252
                  %v254 = vld [vmem:[%s220 + $0x80] sm:$0xff]
                  %255 = vst [vmem:[%s221 + $0x80] sm:$0xff] %v254
                  %v256 = vld [vmem:[%s220 + $0x88] sm:$0xff]
                  %257 = vst [vmem:[%s221 + $0x88] sm:$0xff] %v256
                  %v258 = vld [vmem:[%s220 + $0x90] sm:$0xff]
                  %259 = vst [vmem:[%s221 + $0x90] sm:$0xff] %v258
                  %v260 = vld [vmem:[%s220 + $0x98] sm:$0xff]
                  %261 = vst [vmem:[%s221 + $0x98] sm:$0xff] %v260
                  %v262 = vld [vmem:[%s220 + $0x140] sm:$0xff]
                  %263 = vst [vmem:[%s221 + $0xa0] sm:$0xff] %v262
                  %v264 = vld [vmem:[%s220 + $0x148] sm:$0xff]
                  %265 = vst [vmem:[%s221 + $0xa8] sm:$0xff] %v264
                  %v266 = vld [vmem:[%s220 + $0x150] sm:$0xff]
                  %267 = vst [vmem:[%s221 + $0xb0] sm:$0xff] %v266
                  %v268 = vld [vmem:[%s220 + $0x158] sm:$0xff]
                  %269 = vst [vmem:[%s221 + $0xb8] sm:$0xff] %v268
                  %v270 = vld [vmem:[%s220 + $0x160] sm:$0xff]
                  %271 = vst [vmem:[%s221 + $0xc0] sm:$0xff] %v270
                  %v272 = vld [vmem:[%s220 + $0x168] sm:$0xff]
                  %273 = vst [vmem:[%s221 + $0xc8] sm:$0xff] %v272
                  %v274 = vld [vmem:[%s220 + $0x170] sm:$0xff]
                  %275 = vst [vmem:[%s221 + $0xd0] sm:$0xff] %v274
                  %v276 = vld [vmem:[%s220 + $0x178] sm:$0xff]
                  %277 = vst [vmem:[%s221 + $0xd8] sm:$0xff] %v276
                  %v278 = vld [vmem:[%s220 + $0x180] sm:$0xff]
                  %279 = vst [vmem:[%s221 + $0xe0] sm:$0xff] %v278
                  %v280 = vld [vmem:[%s220 + $0x188] sm:$0xff]
                  %281 = vst [vmem:[%s221 + $0xe8] sm:$0xff] %v280
                  %v282 = vld [vmem:[%s220 + $0x190] sm:$0xff]
                  %283 = vst [vmem:[%s221 + $0xf0] sm:$0xff] %v282
                  %v284 = vld [vmem:[%s220 + $0x198] sm:$0xff]
                  %285 = vst [vmem:[%s221 + $0xf8] sm:$0xff] %v284
                  %v286 = vld [vmem:[%s220 + $0x1a0] sm:$0xff]
                  %287 = vst [vmem:[%s221 + $0x100] sm:$0xff] %v286
                  %v288 = vld [vmem:[%s220 + $0x1a8] sm:$0xff]
                  %289 = vst [vmem:[%s221 + $0x108] sm:$0xff] %v288
                  %v290 = vld [vmem:[%s220 + $0x1b0] sm:$0xff]
                  %291 = vst [vmem:[%s221 + $0x110] sm:$0xff] %v290
                  %v292 = vld [vmem:[%s220 + $0x1b8] sm:$0xff]
                  %293 = vst [vmem:[%s221 + $0x118] sm:$0xff] %v292
                  %v294 = vld [vmem:[%s220 + $0x1c0] sm:$0xff]
                  %295 = vst [vmem:[%s221 + $0x120] sm:$0xff] %v294
                  %v296 = vld [vmem:[%s220 + $0x1c8] sm:$0xff]
                  %297 = vst [vmem:[%s221 + $0x128] sm:$0xff] %v296
                  %v298 = vld [vmem:[%s220 + $0x1d0] sm:$0xff]
                  %299 = vst [vmem:[%s221 + $0x130] sm:$0xff] %v298
                  %v300 = vld [vmem:[%s220 + $0x1d8] sm:$0xff]
                  %301 = vst [vmem:[%s221 + $0x138] sm:$0xff] %v300
                $region48: #{set_criterion_forward.1} parent=42 // loop_footer
                  %s219 = sadd.s32 1, %s215
                $region49: #{set_criterion_forward.1} parent=42 // loop_footer_branch
                  %214 = sbr.rel target = $region45
                $region50: #{set_criterion_forward.1} parent=42 // loop_exit
                  _
              $region43: #{set_criterion_forward.1} parent=27 // pred_fallthru
                _
              // Predicated region
              $region51: #{set_criterion_forward.1} parent=27 // pred_check
                _
              $region52: #{set_criterion_forward.1} parent=27 // pred_check_branch
                %303 = sbr.rel target = $region54
              $region53: #{set_criterion_forward.1} parent=27 // pred_region
                _
              $region54: #{set_criterion_forward.1} parent=27 // pred_fallthru
                _
            $region28: #{set_criterion_forward.1} parent=23 // pred_fallthru
              _
            // Predicated region
            $region29: #{set_criterion_forward.1} parent=23 // pred_check
              _
            $region30: #{set_criterion_forward.1} parent=23 // pred_check_branch
              %121 = sbr.rel target = $region32
            $region31: #{set_criterion_forward.1} parent=23 // pred_region
              %s123 = ssub.s32 256, 1
              loop: start=0, step=1, limit=1
              $region33: #{set_criterion_forward.1} parent=31 // loop_pre_header
                _
              $region34: #{set_criterion_forward.1} parent=31 // loop_header
                %s125 = sphi 0, %s129
                %p126 = scmp.ge.s32.totalorder %s125, 1
                %s130 = sphi %s115, %s115
                %s131 = sphi %s112, %s112
              $region35: #{set_criterion_forward.1} parent=31 // loop_header_branch
                %128 = sbr.rel (%p126) target = $region39
              $region36: #{set_criterion_forward.1} parent=31 // loop_body
                %v132 = vld [vmem:[%s130] sm:%s123]
                %133 = vst [vmem:[%s131] sm:%s123] %v132
                %v134 = vld [vmem:[%s130 + $0x8] sm:%s123]
                %135 = vst [vmem:[%s131 + $0x8] sm:%s123] %v134
                %v136 = vld [vmem:[%s130 + $0x10] sm:%s123]
                %137 = vst [vmem:[%s131 + $0x10] sm:%s123] %v136
                %v138 = vld [vmem:[%s130 + $0x18] sm:%s123]
                %139 = vst [vmem:[%s131 + $0x18] sm:%s123] %v138
                %v140 = vld [vmem:[%s130 + $0x20] sm:%s123]
                %141 = vst [vmem:[%s131 + $0x20] sm:%s123] %v140
                %v142 = vld [vmem:[%s130 + $0x28] sm:%s123]
                %143 = vst [vmem:[%s131 + $0x28] sm:%s123] %v142
                %v144 = vld [vmem:[%s130 + $0x30] sm:%s123]
                %145 = vst [vmem:[%s131 + $0x30] sm:%s123] %v144
                %v146 = vld [vmem:[%s130 + $0x38] sm:%s123]
                %147 = vst [vmem:[%s131 + $0x38] sm:%s123] %v146
                %v148 = vld [vmem:[%s130 + $0x40] sm:%s123]
                %149 = vst [vmem:[%s131 + $0x40] sm:%s123] %v148
                %v150 = vld [vmem:[%s130 + $0x48] sm:%s123]
                %151 = vst [vmem:[%s131 + $0x48] sm:%s123] %v150
                %v152 = vld [vmem:[%s130 + $0x50] sm:%s123]
                %153 = vst [vmem:[%s131 + $0x50] sm:%s123] %v152
                %v154 = vld [vmem:[%s130 + $0x58] sm:%s123]
                %155 = vst [vmem:[%s131 + $0x58] sm:%s123] %v154
                %v156 = vld [vmem:[%s130 + $0x60] sm:%s123]
                %157 = vst [vmem:[%s131 + $0x60] sm:%s123] %v156
                %v158 = vld [vmem:[%s130 + $0x68] sm:%s123]
                %159 = vst [vmem:[%s131 + $0x68] sm:%s123] %v158
                %v160 = vld [vmem:[%s130 + $0x70] sm:%s123]
                %161 = vst [vmem:[%s131 + $0x70] sm:%s123] %v160
                %v162 = vld [vmem:[%s130 + $0x78] sm:%s123]
                %163 = vst [vmem:[%s131 + $0x78] sm:%s123] %v162
                %v164 = vld [vmem:[%s130 + $0x80] sm:%s123]
                %165 = vst [vmem:[%s131 + $0x80] sm:%s123] %v164
                %v166 = vld [vmem:[%s130 + $0x88] sm:%s123]
                %167 = vst [vmem:[%s131 + $0x88] sm:%s123] %v166
                %v168 = vld [vmem:[%s130 + $0x90] sm:%s123]
                %169 = vst [vmem:[%s131 + $0x90] sm:%s123] %v168
                %v170 = vld [vmem:[%s130 + $0x98] sm:%s123]
                %171 = vst [vmem:[%s131 + $0x98] sm:%s123] %v170
                %v172 = vld [vmem:[%s130 + $0x140] sm:%s123]
                %173 = vst [vmem:[%s131 + $0xa0] sm:%s123] %v172
                %v174 = vld [vmem:[%s130 + $0x148] sm:%s123]
                %175 = vst [vmem:[%s131 + $0xa8] sm:%s123] %v174
                %v176 = vld [vmem:[%s130 + $0x150] sm:%s123]
                %177 = vst [vmem:[%s131 + $0xb0] sm:%s123] %v176
                %v178 = vld [vmem:[%s130 + $0x158] sm:%s123]
                %179 = vst [vmem:[%s131 + $0xb8] sm:%s123] %v178
                %v180 = vld [vmem:[%s130 + $0x160] sm:%s123]
                %181 = vst [vmem:[%s131 + $0xc0] sm:%s123] %v180
                %v182 = vld [vmem:[%s130 + $0x168] sm:%s123]
                %183 = vst [vmem:[%s131 + $0xc8] sm:%s123] %v182
                %v184 = vld [vmem:[%s130 + $0x170] sm:%s123]
                %185 = vst [vmem:[%s131 + $0xd0] sm:%s123] %v184
                %v186 = vld [vmem:[%s130 + $0x178] sm:%s123]
                %187 = vst [vmem:[%s131 + $0xd8] sm:%s123] %v186
                %v188 = vld [vmem:[%s130 + $0x180] sm:%s123]
                %189 = vst [vmem:[%s131 + $0xe0] sm:%s123] %v188
                %v190 = vld [vmem:[%s130 + $0x188] sm:%s123]
                %191 = vst [vmem:[%s131 + $0xe8] sm:%s123] %v190
                %v192 = vld [vmem:[%s130 + $0x190] sm:%s123]
                %193 = vst [vmem:[%s131 + $0xf0] sm:%s123] %v192
                %v194 = vld [vmem:[%s130 + $0x198] sm:%s123]
                %195 = vst [vmem:[%s131 + $0xf8] sm:%s123] %v194
                %v196 = vld [vmem:[%s130 + $0x1a0] sm:%s123]
                %197 = vst [vmem:[%s131 + $0x100] sm:%s123] %v196
                %v198 = vld [vmem:[%s130 + $0x1a8] sm:%s123]
                %199 = vst [vmem:[%s131 + $0x108] sm:%s123] %v198
                %v200 = vld [vmem:[%s130 + $0x1b0] sm:%s123]
                %201 = vst [vmem:[%s131 + $0x110] sm:%s123] %v200
                %v202 = vld [vmem:[%s130 + $0x1b8] sm:%s123]
                %203 = vst [vmem:[%s131 + $0x118] sm:%s123] %v202
                %v204 = vld [vmem:[%s130 + $0x1c0] sm:%s123]
                %205 = vst [vmem:[%s131 + $0x120] sm:%s123] %v204
                %v206 = vld [vmem:[%s130 + $0x1c8] sm:%s123]
                %207 = vst [vmem:[%s131 + $0x128] sm:%s123] %v206
                %v208 = vld [vmem:[%s130 + $0x1d0] sm:%s123]
                %209 = vst [vmem:[%s131 + $0x130] sm:%s123] %v208
                %v210 = vld [vmem:[%s130 + $0x1d8] sm:%s123]
                %211 = vst [vmem:[%s131 + $0x138] sm:%s123] %v210
              $region37: #{set_criterion_forward.1} parent=31 // loop_footer
                %s129 = sadd.s32 1, %s125
              $region38: #{set_criterion_forward.1} parent=31 // loop_footer_branch
                %124 = sbr.rel target = $region34
              $region39: #{set_criterion_forward.1} parent=31 // loop_exit
                _
            $region32: #{set_criterion_forward.1} parent=23 // pred_fallthru
              _
          $region24: #{set_criterion_forward.1} parent=19 // pred_fallthru
            _
          %304 = vnop
        $region20: #{set_criterion_forward.1} parent=15 // pred_fallthru
          _
      $region16: #{set_criterion_forward.1} parent=5 // pred_fallthru
        _
      %p305 = scmp.le.s32.totalorder 1, %s9
      %p306 = scmp.lt.s32.totalorder %s9, 3
      %p307 = pnand %p305, %p306
      %p308 = pneg %p307
      // Predicated region
      $region55: #{set_criterion_forward.1} parent=5 // pred_check
        _
      $region56: #{set_criterion_forward.1} parent=5 // pred_check_branch
        %310 = sbr.rel (%p307) target = $region58
      $region57: #{set_criterion_forward.1} parent=5 // pred_region
        %s311 = ssub.s32 %s9, 1
        %s312 = sand.u32 %s22, 1
        %s313 = sand.u32 %s22, 1
        %s314 = smul.addr %s313, 320
        %s315 = scalar_lea.vmem [#allocation2], %s314
        // Predicated region
        $region59: #{set_criterion_forward.1} parent=57 // pred_check
          %p316 = pneg %p35
        $region60: #{set_criterion_forward.1} parent=57 // pred_check_branch
          %318 = sbr.rel (%p316) target = $region62
        $region61: #{set_criterion_forward.1} parent=57 // pred_region
          _
        $region62: #{set_criterion_forward.1} parent=57 // pred_fallthru
          _
        %s319 = sand.u32 %s22, 1
        %s320 = sand.u32 %s22, 1
        %s321 = smul.addr %s320, 320
        %s322 = scalar_lea.vmem [#allocation2], %s321
        %p323 = pneg %p35
        %p324 = pneg %p32
        %p325 = pneg %p61
        %p326 = pneg %p58
        %p327 = scmp.lt.s32.totalorder %s14, 1
        %s328 = scalar_select %p327, %s14, 1
        %s329 = scalar_lea.vmem %s1, %s328
        %p330 = pneg %p87
        %p331 = pneg %p84
        %p332 = scmp.lt.s32.totalorder %s14, 1
        %s333 = scalar_select %p332, %s14, 1
        %s334 = smul.addr %s333, 2
        %s335 = scalar_lea.vmem %s2, %s334
        %s336 = smul.u32 20, %s14
        %p337 = scmp.lt.s32.totalorder %s14, 1
        %s338 = scalar_select %p337, %s14, 1
        %s339 = scalar_lea.vmem %s1, %s338
        %p340 = scmp.lt.s32.totalorder %s14, 1
        %s341 = scalar_select %p340, %s14, 1
        %s342 = smul.addr %s341, 2
        %s343 = scalar_lea.vmem %s2, %s342
        %v344 = vld [vmem:[%s315] sm:$0xff]
        %v345 = vld [vmem:[%s315 + $0x8] sm:$0xff]
        %v346 = vld [vmem:[%s315 + $0x10] sm:$0xff]
        %v347 = vld [vmem:[%s315 + $0x18] sm:$0xff]
        %v348 = vld [vmem:[%s315 + $0x20] sm:$0xff]
        %v349 = vld [vmem:[%s315 + $0x28] sm:$0xff]
        %v350 = vld [vmem:[%s315 + $0x30] sm:$0xff]
        %v351 = vld [vmem:[%s315 + $0x38] sm:$0xff]
        %v352 = vld [vmem:[%s315 + $0x40] sm:$0xff]
        %v353 = vld [vmem:[%s315 + $0x48] sm:$0xff]
        %v354 = vld [vmem:[%s315 + $0x50] sm:$0xff]
        %v355 = vld [vmem:[%s315 + $0x58] sm:$0xff]
        %v356 = vld [vmem:[%s315 + $0x60] sm:$0xff]
        %v357 = vld [vmem:[%s315 + $0x68] sm:$0xff]
        %v358 = vld [vmem:[%s315 + $0x70] sm:$0xff]
        %v359 = vld [vmem:[%s315 + $0x78] sm:$0xff]
        %v360 = vld [vmem:[%s315 + $0x80] sm:$0xff]
        %v361 = vld [vmem:[%s315 + $0x88] sm:$0xff]
        %v362 = vld [vmem:[%s315 + $0x90] sm:$0xff]
        %v363 = vld [vmem:[%s315 + $0x98] sm:$0xff]
        %v364 = vld [vmem:[%s315 + $0xa0] sm:$0xff]
        %v365 = vld [vmem:[%s315 + $0xa8] sm:$0xff]
        %v366 = vld [vmem:[%s315 + $0xb0] sm:$0xff]
        %v367 = vld [vmem:[%s315 + $0xb8] sm:$0xff]
        %v368 = vld [vmem:[%s315 + $0xc0] sm:$0xff]
        %v369 = vld [vmem:[%s315 + $0xc8] sm:$0xff]
        %v370 = vld [vmem:[%s315 + $0xd0] sm:$0xff]
        %v371 = vld [vmem:[%s315 + $0xd8] sm:$0xff]
        %v372 = vld [vmem:[%s315 + $0xe0] sm:$0xff]
        %v373 = vld [vmem:[%s315 + $0xe8] sm:$0xff]
        %v374 = vld [vmem:[%s315 + $0xf0] sm:$0xff]
        %v375 = vld [vmem:[%s315 + $0xf8] sm:$0xff]
        %v376 = vld [vmem:[%s315 + $0x100] sm:$0xff]
        %v377 = vld [vmem:[%s315 + $0x108] sm:$0xff]
        %v378 = vld [vmem:[%s315 + $0x110] sm:$0xff]
        %v379 = vld [vmem:[%s315 + $0x118] sm:$0xff]
        %v380 = vld [vmem:[%s315 + $0x120] sm:$0xff]
        %v381 = vld [vmem:[%s315 + $0x128] sm:$0xff]
        %v382 = vld [vmem:[%s315 + $0x130] sm:$0xff]
        %v383 = vld [vmem:[%s315 + $0x138] sm:$0xff]
        %v384 = vand.u32 2147483647, %v344
        %v385 = vand.u32 2147483647, %v345
        %v386 = vand.u32 2147483647, %v346
        %v387 = vand.u32 2147483647, %v347
        %v388 = vand.u32 2147483647, %v348
        %v389 = vand.u32 2147483647, %v349
        %v390 = vand.u32 2147483647, %v350
        %v391 = vand.u32 2147483647, %v351
        %v392 = vand.u32 2147483647, %v352
        %v393 = vand.u32 2147483647, %v353
        %v394 = vand.u32 2147483647, %v354
        %v395 = vand.u32 2147483647, %v355
        %v396 = vand.u32 2147483647, %v356
        %v397 = vand.u32 2147483647, %v357
        %v398 = vand.u32 2147483647, %v358
        %v399 = vand.u32 2147483647, %v359
        %v400 = vand.u32 2147483647, %v360
        %v401 = vand.u32 2147483647, %v361
        %v402 = vand.u32 2147483647, %v362
        %v403 = vand.u32 2147483647, %v363
        %v404 = vand.u32 2147483647, %v364
        %v405 = vand.u32 2147483647, %v365
        %v406 = vand.u32 2147483647, %v366
        %v407 = vand.u32 2147483647, %v367
        %v408 = vand.u32 2147483647, %v368
        %v409 = vand.u32 2147483647, %v369
        %v410 = vand.u32 2147483647, %v370
        %v411 = vand.u32 2147483647, %v371
        %v412 = vand.u32 2147483647, %v372
        %v413 = vand.u32 2147483647, %v373
        %v414 = vand.u32 2147483647, %v374
        %v415 = vand.u32 2147483647, %v375
        %v416 = vand.u32 2147483647, %v376
        %v417 = vand.u32 2147483647, %v377
        %v418 = vand.u32 2147483647, %v378
        %v419 = vand.u32 2147483647, %v379
        %v420 = vand.u32 2147483647, %v380
        %v421 = vand.u32 2147483647, %v381
        %v422 = vand.u32 2147483647, %v382
        %v423 = vand.u32 2147483647, %v383
        %v424 = vsub.f32 0.0, %v384
        %v425 = vsub.f32 0.0, %v385
        %v426 = vsub.f32 0.0, %v386
        %v427 = vsub.f32 0.0, %v387
        %v428 = vsub.f32 0.0, %v388
        %v429 = vsub.f32 0.0, %v389
        %v430 = vsub.f32 0.0, %v390
        %v431 = vsub.f32 0.0, %v391
        %v432 = vsub.f32 0.0, %v392
        %v433 = vsub.f32 0.0, %v393
        %v434 = vsub.f32 0.0, %v394
        %v435 = vsub.f32 0.0, %v395
        %v436 = vsub.f32 0.0, %v396
        %v437 = vsub.f32 0.0, %v397
        %v438 = vsub.f32 0.0, %v398
        %v439 = vsub.f32 0.0, %v399
        %v440 = vsub.f32 0.0, %v400
        %v441 = vsub.f32 0.0, %v401
        %v442 = vsub.f32 0.0, %v402
        %v443 = vsub.f32 0.0, %v403
        %v444 = vsub.f32 0.0, %v404
        %v445 = vsub.f32 0.0, %v405
        %v446 = vsub.f32 0.0, %v406
        %v447 = vsub.f32 0.0, %v407
        %v448 = vsub.f32 0.0, %v408
        %v449 = vsub.f32 0.0, %v409
        %v450 = vsub.f32 0.0, %v410
        %v451 = vsub.f32 0.0, %v411
        %v452 = vsub.f32 0.0, %v412
        %v453 = vsub.f32 0.0, %v413
        %v454 = vsub.f32 0.0, %v414
        %v455 = vsub.f32 0.0, %v415
        %v456 = vsub.f32 0.0, %v416
        %v457 = vsub.f32 0.0, %v417
        %v458 = vsub.f32 0.0, %v418
        %v459 = vsub.f32 0.0, %v419
        %v460 = vsub.f32 0.0, %v420
        %v461 = vsub.f32 0.0, %v421
        %v462 = vsub.f32 0.0, %v422
        %v463 = vsub.f32 0.0, %v423
        %v464 = vmul.f32 %v424, 1.442695
        %v465 = vpow.pop %v464
        %v466 = vmul.f32 %v425, 1.442695
        %v467 = vpow.pop %v466
        %v468 = vmul.f32 %v426, 1.442695
        %v469 = vpow.pop %v468
        %v470 = vmul.f32 %v427, 1.442695
        %v471 = vpow.pop %v470
        %v472 = vmul.f32 %v428, 1.442695
        %v473 = vpow.pop %v472
        %v474 = vmul.f32 %v429, 1.442695
        %v475 = vpow.pop %v474
        %v476 = vmul.f32 %v430, 1.442695
        %v477 = vpow.pop %v476
        %v478 = vmul.f32 %v431, 1.442695
        %v479 = vpow.pop %v478
        %v480 = vmul.f32 %v432, 1.442695
        %v481 = vpow.pop %v480
        %v482 = vmul.f32 %v433, 1.442695
        %v483 = vpow.pop %v482
        %v484 = vmul.f32 %v434, 1.442695
        %v485 = vpow.pop %v484
        %v486 = vmul.f32 %v435, 1.442695
        %v487 = vpow.pop %v486
        %v488 = vmul.f32 %v436, 1.442695
        %v489 = vpow.pop %v488
        %v490 = vmul.f32 %v437, 1.442695
        %v491 = vpow.pop %v490
        %v492 = vmul.f32 %v438, 1.442695
        %v493 = vpow.pop %v492
        %v494 = vmul.f32 %v439, 1.442695
        %v495 = vpow.pop %v494
        %v496 = vmul.f32 %v440, 1.442695
        %v497 = vpow.pop %v496
        %v498 = vmul.f32 %v441, 1.442695
        %v499 = vpow.pop %v498
        %v500 = vmul.f32 %v442, 1.442695
        %v501 = vpow.pop %v500
        %v502 = vmul.f32 %v443, 1.442695
        %v503 = vpow.pop %v502
        %v504 = vmul.f32 %v444, 1.442695
        %v505 = vpow.pop %v504
        %v506 = vmul.f32 %v445, 1.442695
        %v507 = vpow.pop %v506
        %v508 = vmul.f32 %v446, 1.442695
        %v509 = vpow.pop %v508
        %v510 = vmul.f32 %v447, 1.442695
        %v511 = vpow.pop %v510
        %v512 = vmul.f32 %v448, 1.442695
        %v513 = vpow.pop %v512
        %v514 = vmul.f32 %v449, 1.442695
        %v515 = vpow.pop %v514
        %v516 = vmul.f32 %v450, 1.442695
        %v517 = vpow.pop %v516
        %v518 = vmul.f32 %v451, 1.442695
        %v519 = vpow.pop %v518
        %v520 = vmul.f32 %v452, 1.442695
        %v521 = vpow.pop %v520
        %v522 = vmul.f32 %v453, 1.442695
        %v523 = vpow.pop %v522
        %v524 = vmul.f32 %v454, 1.442695
        %v525 = vpow.pop %v524
        %v526 = vmul.f32 %v455, 1.442695
        %v527 = vpow.pop %v526
        %v528 = vmul.f32 %v456, 1.442695
        %v529 = vpow.pop %v528
        %v530 = vmul.f32 %v457, 1.442695
        %v531 = vpow.pop %v530
        %v532 = vmul.f32 %v458, 1.442695
        %v533 = vpow.pop %v532
        %v534 = vmul.f32 %v459, 1.442695
        %v535 = vpow.pop %v534
        %v536 = vmul.f32 %v460, 1.442695
        %v537 = vpow.pop %v536
        %v538 = vmul.f32 %v461, 1.442695
        %v539 = vpow.pop %v538
        %v540 = vmul.f32 %v462, 1.442695
        %v541 = vpow.pop %v540
        %v542 = vmul.f32 %v463, 1.442695
        %v543 = vpow.pop %v542
        %v544 = vmax.f32 %v344, 0.0
        %v545 = vmax.f32 %v345, 0.0
        %v546 = vmax.f32 %v346, 0.0
        %v547 = vmax.f32 %v347, 0.0
        %v548 = vmax.f32 %v348, 0.0
        %v549 = vmax.f32 %v349, 0.0
        %v550 = vmax.f32 %v350, 0.0
        %v551 = vmax.f32 %v351, 0.0
        %v552 = vmax.f32 %v352, 0.0
        %v553 = vmax.f32 %v353, 0.0
        %v554 = vmax.f32 %v354, 0.0
        %v555 = vmax.f32 %v355, 0.0
        %v556 = vmax.f32 %v356, 0.0
        %v557 = vmax.f32 %v357, 0.0
        %v558 = vmax.f32 %v358, 0.0
        %v559 = vmax.f32 %v359, 0.0
        %v560 = vmax.f32 %v360, 0.0
        %v561 = vmax.f32 %v361, 0.0
        %v562 = vmax.f32 %v362, 0.0
        %v563 = vmax.f32 %v363, 0.0
        %v564 = vmax.f32 %v364, 0.0
        %v565 = vmax.f32 %v365, 0.0
        %v566 = vmax.f32 %v366, 0.0
        %v567 = vmax.f32 %v367, 0.0
        %v568 = vmax.f32 %v368, 0.0
        %v569 = vmax.f32 %v369, 0.0
        %v570 = vmax.f32 %v370, 0.0
        %v571 = vmax.f32 %v371, 0.0
        %v572 = vmax.f32 %v372, 0.0
        %v573 = vmax.f32 %v373, 0.0
        %v574 = vmax.f32 %v374, 0.0
        %v575 = vmax.f32 %v375, 0.0
        %v576 = vmax.f32 %v376, 0.0
        %v577 = vmax.f32 %v377, 0.0
        %v578 = vmax.f32 %v378, 0.0
        %v579 = vmax.f32 %v379, 0.0
        %v580 = vmax.f32 %v380, 0.0
        %v581 = vmax.f32 %v381, 0.0
        %v582 = vmax.f32 %v382, 0.0
        %v583 = vmax.f32 %v383, 0.0
        %v584 = vadd.f32 %v465, 1.0
        %v585 = vlog2.pop %v584
        %v586 = vmul.f32 %v585, 0.6931472
        %v587 = vmul.f32 -0.5, %v465
        %v588 = vadd.f32 %v587, 1.0
        %v589 = vmul.f32 %v588, %v465
        %v590 = vand.u32 2147483647, %v465
        %vm591 = vcmp.lt.f32.partialorder %v590, 0.0004427343
        %v592 = vsel %vm591, %v589, %v586
        %v593 = vadd.f32 %v467, 1.0
        %v594 = vlog2.pop %v593
        %v595 = vmul.f32 %v594, 0.6931472
        %v596 = vmul.f32 -0.5, %v467
        %v597 = vadd.f32 %v596, 1.0
        %v598 = vmul.f32 %v597, %v467
        %v599 = vand.u32 2147483647, %v467
        %vm600 = vcmp.lt.f32.partialorder %v599, 0.0004427343
        %v601 = vsel %vm600, %v598, %v595
        %v602 = vadd.f32 %v469, 1.0
        %v603 = vlog2.pop %v602
        %v604 = vmul.f32 %v603, 0.6931472
        %v605 = vmul.f32 -0.5, %v469
        %v606 = vadd.f32 %v605, 1.0
        %v607 = vmul.f32 %v606, %v469
        %v608 = vand.u32 2147483647, %v469
        %vm609 = vcmp.lt.f32.partialorder %v608, 0.0004427343
        %v610 = vsel %vm609, %v607, %v604
        %v611 = vadd.f32 %v471, 1.0
        %v612 = vlog2.pop %v611
        %v613 = vmul.f32 %v612, 0.6931472
        %v614 = vmul.f32 -0.5, %v471
        %v615 = vadd.f32 %v614, 1.0
        %v616 = vmul.f32 %v615, %v471
        %v617 = vand.u32 2147483647, %v471
        %vm618 = vcmp.lt.f32.partialorder %v617, 0.0004427343
        %v619 = vsel %vm618, %v616, %v613
        %v620 = vadd.f32 %v473, 1.0
        %v621 = vlog2.pop %v620
        %v622 = vmul.f32 %v621, 0.6931472
        %v623 = vmul.f32 -0.5, %v473
        %v624 = vadd.f32 %v623, 1.0
        %v625 = vmul.f32 %v624, %v473
        %v626 = vand.u32 2147483647, %v473
        %vm627 = vcmp.lt.f32.partialorder %v626, 0.0004427343
        %v628 = vsel %vm627, %v625, %v622
        %v629 = vadd.f32 %v475, 1.0
        %v630 = vlog2.pop %v629
        %v631 = vmul.f32 %v630, 0.6931472
        %v632 = vmul.f32 -0.5, %v475
        %v633 = vadd.f32 %v632, 1.0
        %v634 = vmul.f32 %v633, %v475
        %v635 = vand.u32 2147483647, %v475
        %vm636 = vcmp.lt.f32.partialorder %v635, 0.0004427343
        %v637 = vsel %vm636, %v634, %v631
        %v638 = vadd.f32 %v477, 1.0
        %v639 = vlog2.pop %v638
        %v640 = vmul.f32 %v639, 0.6931472
        %v641 = vmul.f32 -0.5, %v477
        %v642 = vadd.f32 %v641, 1.0
        %v643 = vmul.f32 %v642, %v477
        %v644 = vand.u32 2147483647, %v477
        %vm645 = vcmp.lt.f32.partialorder %v644, 0.0004427343
        %v646 = vsel %vm645, %v643, %v640
        %v647 = vadd.f32 %v479, 1.0
        %v648 = vlog2.pop %v647
        %v649 = vmul.f32 %v648, 0.6931472
        %v650 = vmul.f32 -0.5, %v479
        %v651 = vadd.f32 %v650, 1.0
        %v652 = vmul.f32 %v651, %v479
        %v653 = vand.u32 2147483647, %v479
        %vm654 = vcmp.lt.f32.partialorder %v653, 0.0004427343
        %v655 = vsel %vm654, %v652, %v649
        %v656 = vadd.f32 %v481, 1.0
        %v657 = vlog2.pop %v656
        %v658 = vmul.f32 %v657, 0.6931472
        %v659 = vmul.f32 -0.5, %v481
        %v660 = vadd.f32 %v659, 1.0
        %v661 = vmul.f32 %v660, %v481
        %v662 = vand.u32 2147483647, %v481
        %vm663 = vcmp.lt.f32.partialorder %v662, 0.0004427343
        %v664 = vsel %vm663, %v661, %v658
        %v665 = vadd.f32 %v483, 1.0
        %v666 = vlog2.pop %v665
        %v667 = vmul.f32 %v666, 0.6931472
        %v668 = vmul.f32 -0.5, %v483
        %v669 = vadd.f32 %v668, 1.0
        %v670 = vmul.f32 %v669, %v483
        %v671 = vand.u32 2147483647, %v483
        %vm672 = vcmp.lt.f32.partialorder %v671, 0.0004427343
        %v673 = vsel %vm672, %v670, %v667
        %v674 = vadd.f32 %v485, 1.0
        %v675 = vlog2.pop %v674
        %v676 = vmul.f32 %v675, 0.6931472
        %v677 = vmul.f32 -0.5, %v485
        %v678 = vadd.f32 %v677, 1.0
        %v679 = vmul.f32 %v678, %v485
        %v680 = vand.u32 2147483647, %v485
        %vm681 = vcmp.lt.f32.partialorder %v680, 0.0004427343
        %v682 = vsel %vm681, %v679, %v676
        %v683 = vadd.f32 %v487, 1.0
        %v684 = vlog2.pop %v683
        %v685 = vmul.f32 %v684, 0.6931472
        %v686 = vmul.f32 -0.5, %v487
        %v687 = vadd.f32 %v686, 1.0
        %v688 = vmul.f32 %v687, %v487
        %v689 = vand.u32 2147483647, %v487
        %vm690 = vcmp.lt.f32.partialorder %v689, 0.0004427343
        %v691 = vsel %vm690, %v688, %v685
        %v692 = vadd.f32 %v489, 1.0
        %v693 = vlog2.pop %v692
        %v694 = vmul.f32 %v693, 0.6931472
        %v695 = vmul.f32 -0.5, %v489
        %v696 = vadd.f32 %v695, 1.0
        %v697 = vmul.f32 %v696, %v489
        %v698 = vand.u32 2147483647, %v489
        %vm699 = vcmp.lt.f32.partialorder %v698, 0.0004427343
        %v700 = vsel %vm699, %v697, %v694
        %v701 = vadd.f32 %v491, 1.0
        %v702 = vlog2.pop %v701
        %v703 = vmul.f32 %v702, 0.6931472
        %v704 = vmul.f32 -0.5, %v491
        %v705 = vadd.f32 %v704, 1.0
        %v706 = vmul.f32 %v705, %v491
        %v707 = vand.u32 2147483647, %v491
        %vm708 = vcmp.lt.f32.partialorder %v707, 0.0004427343
        %v709 = vsel %vm708, %v706, %v703
        %v710 = vadd.f32 %v493, 1.0
        %v711 = vlog2.pop %v710
        %v712 = vmul.f32 %v711, 0.6931472
        %v713 = vmul.f32 -0.5, %v493
        %v714 = vadd.f32 %v713, 1.0
        %v715 = vmul.f32 %v714, %v493
        %v716 = vand.u32 2147483647, %v493
        %vm717 = vcmp.lt.f32.partialorder %v716, 0.0004427343
        %v718 = vsel %vm717, %v715, %v712
        %v719 = vadd.f32 %v495, 1.0
        %v720 = vlog2.pop %v719
        %v721 = vmul.f32 %v720, 0.6931472
        %v722 = vmul.f32 -0.5, %v495
        %v723 = vadd.f32 %v722, 1.0
        %v724 = vmul.f32 %v723, %v495
        %v725 = vand.u32 2147483647, %v495
        %vm726 = vcmp.lt.f32.partialorder %v725, 0.0004427343
        %v727 = vsel %vm726, %v724, %v721
        %v728 = vadd.f32 %v497, 1.0
        %v729 = vlog2.pop %v728
        %v730 = vmul.f32 %v729, 0.6931472
        %v731 = vmul.f32 -0.5, %v497
        %v732 = vadd.f32 %v731, 1.0
        %v733 = vmul.f32 %v732, %v497
        %v734 = vand.u32 2147483647, %v497
        %vm735 = vcmp.lt.f32.partialorder %v734, 0.0004427343
        %v736 = vsel %vm735, %v733, %v730
        %v737 = vadd.f32 %v499, 1.0
        %v738 = vlog2.pop %v737
        %v739 = vmul.f32 %v738, 0.6931472
        %v740 = vmul.f32 -0.5, %v499
        %v741 = vadd.f32 %v740, 1.0
        %v742 = vmul.f32 %v741, %v499
        %v743 = vand.u32 2147483647, %v499
        %vm744 = vcmp.lt.f32.partialorder %v743, 0.0004427343
        %v745 = vsel %vm744, %v742, %v739
        %v746 = vadd.f32 %v501, 1.0
        %v747 = vlog2.pop %v746
        %v748 = vmul.f32 %v747, 0.6931472
        %v749 = vmul.f32 -0.5, %v501
        %v750 = vadd.f32 %v749, 1.0
        %v751 = vmul.f32 %v750, %v501
        %v752 = vand.u32 2147483647, %v501
        %vm753 = vcmp.lt.f32.partialorder %v752, 0.0004427343
        %v754 = vsel %vm753, %v751, %v748
        %v755 = vadd.f32 %v503, 1.0
        %v756 = vlog2.pop %v755
        %v757 = vmul.f32 %v756, 0.6931472
        %v758 = vmul.f32 -0.5, %v503
        %v759 = vadd.f32 %v758, 1.0
        %v760 = vmul.f32 %v759, %v503
        %v761 = vand.u32 2147483647, %v503
        %vm762 = vcmp.lt.f32.partialorder %v761, 0.0004427343
        %v763 = vsel %vm762, %v760, %v757
        %v764 = vadd.f32 %v505, 1.0
        %v765 = vlog2.pop %v764
        %v766 = vmul.f32 %v765, 0.6931472
        %v767 = vmul.f32 -0.5, %v505
        %v768 = vadd.f32 %v767, 1.0
        %v769 = vmul.f32 %v768, %v505
        %v770 = vand.u32 2147483647, %v505
        %vm771 = vcmp.lt.f32.partialorder %v770, 0.0004427343
        %v772 = vsel %vm771, %v769, %v766
        %v773 = vadd.f32 %v507, 1.0
        %v774 = vlog2.pop %v773
        %v775 = vmul.f32 %v774, 0.6931472
        %v776 = vmul.f32 -0.5, %v507
        %v777 = vadd.f32 %v776, 1.0
        %v778 = vmul.f32 %v777, %v507
        %v779 = vand.u32 2147483647, %v507
        %vm780 = vcmp.lt.f32.partialorder %v779, 0.0004427343
        %v781 = vsel %vm780, %v778, %v775
        %v782 = vadd.f32 %v509, 1.0
        %v783 = vlog2.pop %v782
        %v784 = vmul.f32 %v783, 0.6931472
        %v785 = vmul.f32 -0.5, %v509
        %v786 = vadd.f32 %v785, 1.0
        %v787 = vmul.f32 %v786, %v509
        %v788 = vand.u32 2147483647, %v509
        %vm789 = vcmp.lt.f32.partialorder %v788, 0.0004427343
        %v790 = vsel %vm789, %v787, %v784
        %v791 = vadd.f32 %v511, 1.0
        %v792 = vlog2.pop %v791
        %v793 = vmul.f32 %v792, 0.6931472
        %v794 = vmul.f32 -0.5, %v511
        %v795 = vadd.f32 %v794, 1.0
        %v796 = vmul.f32 %v795, %v511
        %v797 = vand.u32 2147483647, %v511
        %vm798 = vcmp.lt.f32.partialorder %v797, 0.0004427343
        %v799 = vsel %vm798, %v796, %v793
        %v800 = vadd.f32 %v513, 1.0
        %v801 = vlog2.pop %v800
        %v802 = vmul.f32 %v801, 0.6931472
        %v803 = vmul.f32 -0.5, %v513
        %v804 = vadd.f32 %v803, 1.0
        %v805 = vmul.f32 %v804, %v513
        %v806 = vand.u32 2147483647, %v513
        %vm807 = vcmp.lt.f32.partialorder %v806, 0.0004427343
        %v808 = vsel %vm807, %v805, %v802
        %v809 = vadd.f32 %v515, 1.0
        %v810 = vlog2.pop %v809
        %v811 = vmul.f32 %v810, 0.6931472
        %v812 = vmul.f32 -0.5, %v515
        %v813 = vadd.f32 %v812, 1.0
        %v814 = vmul.f32 %v813, %v515
        %v815 = vand.u32 2147483647, %v515
        %vm816 = vcmp.lt.f32.partialorder %v815, 0.0004427343
        %v817 = vsel %vm816, %v814, %v811
        %v818 = vadd.f32 %v517, 1.0
        %v819 = vlog2.pop %v818
        %v820 = vmul.f32 %v819, 0.6931472
        %v821 = vmul.f32 -0.5, %v517
        %v822 = vadd.f32 %v821, 1.0
        %v823 = vmul.f32 %v822, %v517
        %v824 = vand.u32 2147483647, %v517
        %vm825 = vcmp.lt.f32.partialorder %v824, 0.0004427343
        %v826 = vsel %vm825, %v823, %v820
        %v827 = vadd.f32 %v519, 1.0
        %v828 = vlog2.pop %v827
        %v829 = vmul.f32 %v828, 0.6931472
        %v830 = vmul.f32 -0.5, %v519
        %v831 = vadd.f32 %v830, 1.0
        %v832 = vmul.f32 %v831, %v519
        %v833 = vand.u32 2147483647, %v519
        %vm834 = vcmp.lt.f32.partialorder %v833, 0.0004427343
        %v835 = vsel %vm834, %v832, %v829
        %v836 = vadd.f32 %v521, 1.0
        %v837 = vlog2.pop %v836
        %v838 = vmul.f32 %v837, 0.6931472
        %v839 = vmul.f32 -0.5, %v521
        %v840 = vadd.f32 %v839, 1.0
        %v841 = vmul.f32 %v840, %v521
        %v842 = vand.u32 2147483647, %v521
        %vm843 = vcmp.lt.f32.partialorder %v842, 0.0004427343
        %v844 = vsel %vm843, %v841, %v838
        %v845 = vadd.f32 %v523, 1.0
        %v846 = vlog2.pop %v845
        %v847 = vmul.f32 %v846, 0.6931472
        %v848 = vmul.f32 -0.5, %v523
        %v849 = vadd.f32 %v848, 1.0
        %v850 = vmul.f32 %v849, %v523
        %v851 = vand.u32 2147483647, %v523
        %vm852 = vcmp.lt.f32.partialorder %v851, 0.0004427343
        %v853 = vsel %vm852, %v850, %v847
        %v854 = vadd.f32 %v525, 1.0
        %v855 = vlog2.pop %v854
        %v856 = vmul.f32 %v855, 0.6931472
        %v857 = vmul.f32 -0.5, %v525
        %v858 = vadd.f32 %v857, 1.0
        %v859 = vmul.f32 %v858, %v525
        %v860 = vand.u32 2147483647, %v525
        %vm861 = vcmp.lt.f32.partialorder %v860, 0.0004427343
        %v862 = vsel %vm861, %v859, %v856
        %v863 = vadd.f32 %v527, 1.0
        %v864 = vlog2.pop %v863
        %v865 = vmul.f32 %v864, 0.6931472
        %v866 = vmul.f32 -0.5, %v527
        %v867 = vadd.f32 %v866, 1.0
        %v868 = vmul.f32 %v867, %v527
        %v869 = vand.u32 2147483647, %v527
        %vm870 = vcmp.lt.f32.partialorder %v869, 0.0004427343
        %v871 = vsel %vm870, %v868, %v865
        %v872 = vadd.f32 %v529, 1.0
        %v873 = vlog2.pop %v872
        %v874 = vmul.f32 %v873, 0.6931472
        %v875 = vmul.f32 -0.5, %v529
        %v876 = vadd.f32 %v875, 1.0
        %v877 = vmul.f32 %v876, %v529
        %v878 = vand.u32 2147483647, %v529
        %vm879 = vcmp.lt.f32.partialorder %v878, 0.0004427343
        %v880 = vsel %vm879, %v877, %v874
        %v881 = vadd.f32 %v531, 1.0
        %v882 = vlog2.pop %v881
        %v883 = vmul.f32 %v882, 0.6931472
        %v884 = vmul.f32 -0.5, %v531
        %v885 = vadd.f32 %v884, 1.0
        %v886 = vmul.f32 %v885, %v531
        %v887 = vand.u32 2147483647, %v531
        %vm888 = vcmp.lt.f32.partialorder %v887, 0.0004427343
        %v889 = vsel %vm888, %v886, %v883
        %v890 = vadd.f32 %v533, 1.0
        %v891 = vlog2.pop %v890
        %v892 = vmul.f32 %v891, 0.6931472
        %v893 = vmul.f32 -0.5, %v533
        %v894 = vadd.f32 %v893, 1.0
        %v895 = vmul.f32 %v894, %v533
        %v896 = vand.u32 2147483647, %v533
        %vm897 = vcmp.lt.f32.partialorder %v896, 0.0004427343
        %v898 = vsel %vm897, %v895, %v892
        %v899 = vadd.f32 %v535, 1.0
        %v900 = vlog2.pop %v899
        %v901 = vmul.f32 %v900, 0.6931472
        %v902 = vmul.f32 -0.5, %v535
        %v903 = vadd.f32 %v902, 1.0
        %v904 = vmul.f32 %v903, %v535
        %v905 = vand.u32 2147483647, %v535
        %vm906 = vcmp.lt.f32.partialorder %v905, 0.0004427343
        %v907 = vsel %vm906, %v904, %v901
        %v908 = vadd.f32 %v537, 1.0
        %v909 = vlog2.pop %v908
        %v910 = vmul.f32 %v909, 0.6931472
        %v911 = vmul.f32 -0.5, %v537
        %v912 = vadd.f32 %v911, 1.0
        %v913 = vmul.f32 %v912, %v537
        %v914 = vand.u32 2147483647, %v537
        %vm915 = vcmp.lt.f32.partialorder %v914, 0.0004427343
        %v916 = vsel %vm915, %v913, %v910
        %v917 = vadd.f32 %v539, 1.0
        %v918 = vlog2.pop %v917
        %v919 = vmul.f32 %v918, 0.6931472
        %v920 = vmul.f32 -0.5, %v539
        %v921 = vadd.f32 %v920, 1.0
        %v922 = vmul.f32 %v921, %v539
        %v923 = vand.u32 2147483647, %v539
        %vm924 = vcmp.lt.f32.partialorder %v923, 0.0004427343
        %v925 = vsel %vm924, %v922, %v919
        %v926 = vadd.f32 %v541, 1.0
        %v927 = vlog2.pop %v926
        %v928 = vmul.f32 %v927, 0.6931472
        %v929 = vmul.f32 -0.5, %v541
        %v930 = vadd.f32 %v929, 1.0
        %v931 = vmul.f32 %v930, %v541
        %v932 = vand.u32 2147483647, %v541
        %vm933 = vcmp.lt.f32.partialorder %v932, 0.0004427343
        %v934 = vsel %vm933, %v931, %v928
        %v935 = vadd.f32 %v543, 1.0
        %v936 = vlog2.pop %v935
        %v937 = vmul.f32 %v936, 0.6931472
        %v938 = vmul.f32 -0.5, %v543
        %v939 = vadd.f32 %v938, 1.0
        %v940 = vmul.f32 %v939, %v543
        %v941 = vand.u32 2147483647, %v543
        %vm942 = vcmp.lt.f32.partialorder %v941, 0.0004427343
        %v943 = vsel %vm942, %v940, %v937
        %v944 = vadd.f32 %v544, %v592
        %v945 = vadd.f32 %v545, %v601
        %v946 = vadd.f32 %v546, %v610
        %v947 = vadd.f32 %v547, %v619
        %v948 = vadd.f32 %v548, %v628
        %v949 = vadd.f32 %v549, %v637
        %v950 = vadd.f32 %v550, %v646
        %v951 = vadd.f32 %v551, %v655
        %v952 = vadd.f32 %v552, %v664
        %v953 = vadd.f32 %v553, %v673
        %v954 = vadd.f32 %v554, %v682
        %v955 = vadd.f32 %v555, %v691
        %v956 = vadd.f32 %v556, %v700
        %v957 = vadd.f32 %v557, %v709
        %v958 = vadd.f32 %v558, %v718
        %v959 = vadd.f32 %v559, %v727
        %v960 = vadd.f32 %v560, %v736
        %v961 = vadd.f32 %v561, %v745
        %v962 = vadd.f32 %v562, %v754
        %v963 = vadd.f32 %v563, %v763
        %v964 = vadd.f32 %v564, %v772
        %v965 = vadd.f32 %v565, %v781
        %v966 = vadd.f32 %v566, %v790
        %v967 = vadd.f32 %v567, %v799
        %v968 = vadd.f32 %v568, %v808
        %v969 = vadd.f32 %v569, %v817
        %v970 = vadd.f32 %v570, %v826
        %v971 = vadd.f32 %v571, %v835
        %v972 = vadd.f32 %v572, %v844
        %v973 = vadd.f32 %v573, %v853
        %v974 = vadd.f32 %v574, %v862
        %v975 = vadd.f32 %v575, %v871
        %v976 = vadd.f32 %v576, %v880
        %v977 = vadd.f32 %v577, %v889
        %v978 = vadd.f32 %v578, %v898
        %v979 = vadd.f32 %v579, %v907
        %v980 = vadd.f32 %v580, %v916
        %v981 = vadd.f32 %v581, %v925
        %v982 = vadd.f32 %v582, %v934
        %v983 = vadd.f32 %v583, %v943
        %v984 = vadd.f32 %v465, 1.0
        %v985 = vadd.f32 %v467, 1.0
        %v986 = vadd.f32 %v469, 1.0
        %v987 = vadd.f32 %v471, 1.0
        %v988 = vadd.f32 %v473, 1.0
        %v989 = vadd.f32 %v475, 1.0
        %v990 = vadd.f32 %v477, 1.0
        %v991 = vadd.f32 %v479, 1.0
        %v992 = vadd.f32 %v481, 1.0
        %v993 = vadd.f32 %v483, 1.0
        %v994 = vadd.f32 %v485, 1.0
        %v995 = vadd.f32 %v487, 1.0
        %v996 = vadd.f32 %v489, 1.0
        %v997 = vadd.f32 %v491, 1.0
        %v998 = vadd.f32 %v493, 1.0
        %v999 = vadd.f32 %v495, 1.0
        %v1000 = vadd.f32 %v497, 1.0
        %v1001 = vadd.f32 %v499, 1.0
        %v1002 = vadd.f32 %v501, 1.0
        %v1003 = vadd.f32 %v503, 1.0
        %v1004 = vadd.f32 %v505, 1.0
        %v1005 = vadd.f32 %v507, 1.0
        %v1006 = vadd.f32 %v509, 1.0
        %v1007 = vadd.f32 %v511, 1.0
        %v1008 = vadd.f32 %v513, 1.0
        %v1009 = vadd.f32 %v515, 1.0
        %v1010 = vadd.f32 %v517, 1.0
        %v1011 = vadd.f32 %v519, 1.0
        %v1012 = vadd.f32 %v521, 1.0
        %v1013 = vadd.f32 %v523, 1.0
        %v1014 = vadd.f32 %v525, 1.0
        %v1015 = vadd.f32 %v527, 1.0
        %v1016 = vadd.f32 %v529, 1.0
        %v1017 = vadd.f32 %v531, 1.0
        %v1018 = vadd.f32 %v533, 1.0
        %v1019 = vadd.f32 %v535, 1.0
        %v1020 = vadd.f32 %v537, 1.0
        %v1021 = vadd.f32 %v539, 1.0
        %v1022 = vadd.f32 %v541, 1.0
        %v1023 = vadd.f32 %v543, 1.0
        %v1024 = vrcp.pop %v984
        %v1025 = vrcp.pop %v985
        %v1026 = vrcp.pop %v986
        %v1027 = vrcp.pop %v987
        %v1028 = vrcp.pop %v988
        %v1029 = vrcp.pop %v989
        %v1030 = vrcp.pop %v990
        %v1031 = vrcp.pop %v991
        %v1032 = vrcp.pop %v992
        %v1033 = vrcp.pop %v993
        %v1034 = vrcp.pop %v994
        %v1035 = vrcp.pop %v995
        %v1036 = vrcp.pop %v996
        %v1037 = vrcp.pop %v997
        %v1038 = vrcp.pop %v998
        %v1039 = vrcp.pop %v999
        %v1040 = vrcp.pop %v1000
        %v1041 = vrcp.pop %v1001
        %v1042 = vrcp.pop %v1002
        %v1043 = vrcp.pop %v1003
        %v1044 = vrcp.pop %v1004
        %v1045 = vrcp.pop %v1005
        %v1046 = vrcp.pop %v1006
        %v1047 = vrcp.pop %v1007
        %v1048 = vrcp.pop %v1008
        %v1049 = vrcp.pop %v1009
        %v1050 = vrcp.pop %v1010
        %v1051 = vrcp.pop %v1011
        %v1052 = vrcp.pop %v1012
        %v1053 = vrcp.pop %v1013
        %v1054 = vrcp.pop %v1014
        %v1055 = vrcp.pop %v1015
        %v1056 = vrcp.pop %v1016
        %v1057 = vrcp.pop %v1017
        %v1058 = vrcp.pop %v1018
        %v1059 = vrcp.pop %v1019
        %v1060 = vrcp.pop %v1020
        %v1061 = vrcp.pop %v1021
        %v1062 = vrcp.pop %v1022
        %v1063 = vrcp.pop %v1023
        %vm1064 = vcmp.ge.f32.partialorder %v344, 0.0
        %vm1065 = vcmp.ge.f32.partialorder %v345, 0.0
        %vm1066 = vcmp.ge.f32.partialorder %v346, 0.0
        %vm1067 = vcmp.ge.f32.partialorder %v347, 0.0
        %vm1068 = vcmp.ge.f32.partialorder %v348, 0.0
        %vm1069 = vcmp.ge.f32.partialorder %v349, 0.0
        %vm1070 = vcmp.ge.f32.partialorder %v350, 0.0
        %vm1071 = vcmp.ge.f32.partialorder %v351, 0.0
        %vm1072 = vcmp.ge.f32.partialorder %v352, 0.0
        %vm1073 = vcmp.ge.f32.partialorder %v353, 0.0
        %vm1074 = vcmp.ge.f32.partialorder %v354, 0.0
        %vm1075 = vcmp.ge.f32.partialorder %v355, 0.0
        %vm1076 = vcmp.ge.f32.partialorder %v356, 0.0
        %vm1077 = vcmp.ge.f32.partialorder %v357, 0.0
        %vm1078 = vcmp.ge.f32.partialorder %v358, 0.0
        %vm1079 = vcmp.ge.f32.partialorder %v359, 0.0
        %vm1080 = vcmp.ge.f32.partialorder %v360, 0.0
        %vm1081 = vcmp.ge.f32.partialorder %v361, 0.0
        %vm1082 = vcmp.ge.f32.partialorder %v362, 0.0
        %vm1083 = vcmp.ge.f32.partialorder %v363, 0.0
        %vm1084 = vcmp.ge.f32.partialorder %v364, 0.0
        %vm1085 = vcmp.ge.f32.partialorder %v365, 0.0
        %vm1086 = vcmp.ge.f32.partialorder %v366, 0.0
        %vm1087 = vcmp.ge.f32.partialorder %v367, 0.0
        %vm1088 = vcmp.ge.f32.partialorder %v368, 0.0
        %vm1089 = vcmp.ge.f32.partialorder %v369, 0.0
        %vm1090 = vcmp.ge.f32.partialorder %v370, 0.0
        %vm1091 = vcmp.ge.f32.partialorder %v371, 0.0
        %vm1092 = vcmp.ge.f32.partialorder %v372, 0.0
        %vm1093 = vcmp.ge.f32.partialorder %v373, 0.0
        %vm1094 = vcmp.ge.f32.partialorder %v374, 0.0
        %vm1095 = vcmp.ge.f32.partialorder %v375, 0.0
        %vm1096 = vcmp.ge.f32.partialorder %v376, 0.0
        %vm1097 = vcmp.ge.f32.partialorder %v377, 0.0
        %vm1098 = vcmp.ge.f32.partialorder %v378, 0.0
        %vm1099 = vcmp.ge.f32.partialorder %v379, 0.0
        %vm1100 = vcmp.ge.f32.partialorder %v380, 0.0
        %vm1101 = vcmp.ge.f32.partialorder %v381, 0.0
        %vm1102 = vcmp.ge.f32.partialorder %v382, 0.0
        %vm1103 = vcmp.ge.f32.partialorder %v383, 0.0
        %v1104 = vsub.f32 1.0, %v1024
        %v1105 = vsub.f32 1.0, %v1025
        %v1106 = vsub.f32 1.0, %v1026
        %v1107 = vsub.f32 1.0, %v1027
        %v1108 = vsub.f32 1.0, %v1028
        %v1109 = vsub.f32 1.0, %v1029
        %v1110 = vsub.f32 1.0, %v1030
        %v1111 = vsub.f32 1.0, %v1031
        %v1112 = vsub.f32 1.0, %v1032
        %v1113 = vsub.f32 1.0, %v1033
        %v1114 = vsub.f32 1.0, %v1034
        %v1115 = vsub.f32 1.0, %v1035
        %v1116 = vsub.f32 1.0, %v1036
        %v1117 = vsub.f32 1.0, %v1037
        %v1118 = vsub.f32 1.0, %v1038
        %v1119 = vsub.f32 1.0, %v1039
        %v1120 = vsub.f32 1.0, %v1040
        %v1121 = vsub.f32 1.0, %v1041
        %v1122 = vsub.f32 1.0, %v1042
        %v1123 = vsub.f32 1.0, %v1043
        %v1124 = vsub.f32 1.0, %v1044
        %v1125 = vsub.f32 1.0, %v1045
        %v1126 = vsub.f32 1.0, %v1046
        %v1127 = vsub.f32 1.0, %v1047
        %v1128 = vsub.f32 1.0, %v1048
        %v1129 = vsub.f32 1.0, %v1049
        %v1130 = vsub.f32 1.0, %v1050
        %v1131 = vsub.f32 1.0, %v1051
        %v1132 = vsub.f32 1.0, %v1052
        %v1133 = vsub.f32 1.0, %v1053
        %v1134 = vsub.f32 1.0, %v1054
        %v1135 = vsub.f32 1.0, %v1055
        %v1136 = vsub.f32 1.0, %v1056
        %v1137 = vsub.f32 1.0, %v1057
        %v1138 = vsub.f32 1.0, %v1058
        %v1139 = vsub.f32 1.0, %v1059
        %v1140 = vsub.f32 1.0, %v1060
        %v1141 = vsub.f32 1.0, %v1061
        %v1142 = vsub.f32 1.0, %v1062
        %v1143 = vsub.f32 1.0, %v1063
        %v1144 = vsel %vm1064, %v1024, %v1104
        %v1145 = vsel %vm1065, %v1025, %v1105
        %v1146 = vsel %vm1066, %v1026, %v1106
        %v1147 = vsel %vm1067, %v1027, %v1107
        %v1148 = vsel %vm1068, %v1028, %v1108
        %v1149 = vsel %vm1069, %v1029, %v1109
        %v1150 = vsel %vm1070, %v1030, %v1110
        %v1151 = vsel %vm1071, %v1031, %v1111
        %v1152 = vsel %vm1072, %v1032, %v1112
        %v1153 = vsel %vm1073, %v1033, %v1113
        %v1154 = vsel %vm1074, %v1034, %v1114
        %v1155 = vsel %vm1075, %v1035, %v1115
        %v1156 = vsel %vm1076, %v1036, %v1116
        %v1157 = vsel %vm1077, %v1037, %v1117
        %v1158 = vsel %vm1078, %v1038, %v1118
        %v1159 = vsel %vm1079, %v1039, %v1119
        %v1160 = vsel %vm1080, %v1040, %v1120
        %v1161 = vsel %vm1081, %v1041, %v1121
        %v1162 = vsel %vm1082, %v1042, %v1122
        %v1163 = vsel %vm1083, %v1043, %v1123
        %v1164 = vsel %vm1084, %v1044, %v1124
        %v1165 = vsel %vm1085, %v1045, %v1125
        %v1166 = vsel %vm1086, %v1046, %v1126
        %v1167 = vsel %vm1087, %v1047, %v1127
        %v1168 = vsel %vm1088, %v1048, %v1128
        %v1169 = vsel %vm1089, %v1049, %v1129
        %v1170 = vsel %vm1090, %v1050, %v1130
        %v1171 = vsel %vm1091, %v1051, %v1131
        %v1172 = vsel %vm1092, %v1052, %v1132
        %v1173 = vsel %vm1093, %v1053, %v1133
        %v1174 = vsel %vm1094, %v1054, %v1134
        %v1175 = vsel %vm1095, %v1055, %v1135
        %v1176 = vsel %vm1096, %v1056, %v1136
        %v1177 = vsel %vm1097, %v1057, %v1137
        %v1178 = vsel %vm1098, %v1058, %v1138
        %v1179 = vsel %vm1099, %v1059, %v1139
        %v1180 = vsel %vm1100, %v1060, %v1140
        %v1181 = vsel %vm1101, %v1061, %v1141
        %v1182 = vsel %vm1102, %v1062, %v1142
        %v1183 = vsel %vm1103, %v1063, %v1143
        %v1184 = vmul.f32 %v944, %v1144
        %v1185 = vmul.f32 %v945, %v1145
        %v1186 = vmul.f32 %v946, %v1146
        %v1187 = vmul.f32 %v947, %v1147
        %v1188 = vmul.f32 %v948, %v1148
        %v1189 = vmul.f32 %v949, %v1149
        %v1190 = vmul.f32 %v950, %v1150
        %v1191 = vmul.f32 %v951, %v1151
        %v1192 = vmul.f32 %v952, %v1152
        %v1193 = vmul.f32 %v953, %v1153
        %v1194 = vmul.f32 %v954, %v1154
        %v1195 = vmul.f32 %v955, %v1155
        %v1196 = vmul.f32 %v956, %v1156
        %v1197 = vmul.f32 %v957, %v1157
        %v1198 = vmul.f32 %v958, %v1158
        %v1199 = vmul.f32 %v959, %v1159
        %v1200 = vmul.f32 %v960, %v1160
        %v1201 = vmul.f32 %v961, %v1161
        %v1202 = vmul.f32 %v962, %v1162
        %v1203 = vmul.f32 %v963, %v1163
        %v1204 = vmul.f32 %v964, %v1164
        %v1205 = vmul.f32 %v965, %v1165
        %v1206 = vmul.f32 %v966, %v1166
        %v1207 = vmul.f32 %v967, %v1167
        %v1208 = vmul.f32 %v968, %v1168
        %v1209 = vmul.f32 %v969, %v1169
        %v1210 = vmul.f32 %v970, %v1170
        %v1211 = vmul.f32 %v971, %v1171
        %v1212 = vmul.f32 %v972, %v1172
        %v1213 = vmul.f32 %v973, %v1173
        %v1214 = vmul.f32 %v974, %v1174
        %v1215 = vmul.f32 %v975, %v1175
        %v1216 = vmul.f32 %v976, %v1176
        %v1217 = vmul.f32 %v977, %v1177
        %v1218 = vmul.f32 %v978, %v1178
        %v1219 = vmul.f32 %v979, %v1179
        %v1220 = vmul.f32 %v980, %v1180
        %v1221 = vmul.f32 %v981, %v1181
        %v1222 = vmul.f32 %v982, %v1182
        %v1223 = vmul.f32 %v983, %v1183
        %v1224 = vmul.f32 %v1184, %v1144
        %v1225 = vmul.f32 %v1185, %v1145
        %v1226 = vmul.f32 %v1186, %v1146
        %v1227 = vmul.f32 %v1187, %v1147
        %v1228 = vmul.f32 %v1188, %v1148
        %v1229 = vmul.f32 %v1189, %v1149
        %v1230 = vmul.f32 %v1190, %v1150
        %v1231 = vmul.f32 %v1191, %v1151
        %v1232 = vmul.f32 %v1192, %v1152
        %v1233 = vmul.f32 %v1193, %v1153
        %v1234 = vmul.f32 %v1194, %v1154
        %v1235 = vmul.f32 %v1195, %v1155
        %v1236 = vmul.f32 %v1196, %v1156
        %v1237 = vmul.f32 %v1197, %v1157
        %v1238 = vmul.f32 %v1198, %v1158
        %v1239 = vmul.f32 %v1199, %v1159
        %v1240 = vmul.f32 %v1200, %v1160
        %v1241 = vmul.f32 %v1201, %v1161
        %v1242 = vmul.f32 %v1202, %v1162
        %v1243 = vmul.f32 %v1203, %v1163
        %v1244 = vmul.f32 %v1204, %v1164
        %v1245 = vmul.f32 %v1205, %v1165
        %v1246 = vmul.f32 %v1206, %v1166
        %v1247 = vmul.f32 %v1207, %v1167
        %v1248 = vmul.f32 %v1208, %v1168
        %v1249 = vmul.f32 %v1209, %v1169
        %v1250 = vmul.f32 %v1210, %v1170
        %v1251 = vmul.f32 %v1211, %v1171
        %v1252 = vmul.f32 %v1212, %v1172
        %v1253 = vmul.f32 %v1213, %v1173
        %v1254 = vmul.f32 %v1214, %v1174
        %v1255 = vmul.f32 %v1215, %v1175
        %v1256 = vmul.f32 %v1216, %v1176
        %v1257 = vmul.f32 %v1217, %v1177
        %v1258 = vmul.f32 %v1218, %v1178
        %v1259 = vmul.f32 %v1219, %v1179
        %v1260 = vmul.f32 %v1220, %v1180
        %v1261 = vmul.f32 %v1221, %v1181
        %v1262 = vmul.f32 %v1222, %v1182
        %v1263 = vmul.f32 %v1223, %v1183
        %v1264 = vadd.f32 %v1224, %v1225
        %v1265 = vadd.f32 %v1264, %v1226
        %v1266 = vadd.f32 %v1265, %v1227
        %v1267 = vadd.f32 %v1266, %v1228
        %v1268 = vadd.f32 %v1267, %v1229
        %v1269 = vadd.f32 %v1268, %v1230
        %v1270 = vadd.f32 %v1269, %v1231
        %v1271 = vadd.f32 %v1270, %v1232
        %v1272 = vadd.f32 %v1271, %v1233
        %v1273 = vadd.f32 %v1272, %v1234
        %v1274 = vadd.f32 %v1273, %v1235
        %v1275 = vadd.f32 %v1274, %v1236
        %v1276 = vadd.f32 %v1275, %v1237
        %v1277 = vadd.f32 %v1276, %v1238
        %v1278 = vadd.f32 %v1277, %v1239
        %v1279 = vadd.f32 %v1278, %v1240
        %v1280 = vadd.f32 %v1279, %v1241
        %v1281 = vadd.f32 %v1280, %v1242
        %v1282 = vadd.f32 %v1281, %v1243
        %v1283 = vadd.f32 %v1282, %v1244
        %v1284 = vadd.f32 %v1283, %v1245
        %v1285 = vadd.f32 %v1284, %v1246
        %v1286 = vadd.f32 %v1285, %v1247
        %v1287 = vadd.f32 %v1286, %v1248
        %v1288 = vadd.f32 %v1287, %v1249
        %v1289 = vadd.f32 %v1288, %v1250
        %v1290 = vadd.f32 %v1289, %v1251
        %v1291 = vadd.f32 %v1290, %v1252
        %v1292 = vadd.f32 %v1291, %v1253
        %v1293 = vadd.f32 %v1292, %v1254
        %v1294 = vadd.f32 %v1293, %v1255
        %v1295 = vadd.f32 %v1294, %v1256
        %v1296 = vadd.f32 %v1295, %v1257
        %v1297 = vadd.f32 %v1296, %v1258
        %v1298 = vadd.f32 %v1297, %v1259
        %v1299 = vadd.f32 %v1298, %v1260
        %v1300 = vadd.f32 %v1299, %v1261
        %v1301 = vadd.f32 %v1300, %v1262
        %v1302 = vadd.f32 %v1301, %v1263
        %1303 = vadd.xlane.f32.xlu0 %v1302
        %v1304 = vpop.xlane.xlu0 %1303
        %v1305 = vrot.slane %v1304, 4
        %v1306 = vadd.f32 %v1304, %v1305
        %v1307 = vrot.slane %v1306, 2
        %v1308 = vadd.f32 %v1306, %v1307
        %v1309 = vrot.slane %v1308, 1
        %v1310 = vadd.f32 %v1308, %v1309
        %s1311 = vtos %v1310
        %v1312 = vstv %s1311
        %vm1313 = vcmask 0
        %1314 = vst.msk [vmem:[%s339] sm:$0x1] %vm1313, %v1312
        %v1315 = vlaneseq
        %v1316 = vand.u32 %v1315, 127
        %vm1317 = vcmp.eq.s32.totalorder %v1316, 90
        %v1318 = vsel %vm1317, %v344, -3e+38
        %v1319 = vsel %vm1317, %v345, -3e+38
        %v1320 = vsel %vm1317, %v346, -3e+38
        %v1321 = vsel %vm1317, %v347, -3e+38
        %v1322 = vsel %vm1317, %v348, -3e+38
        %v1323 = vsel %vm1317, %v349, -3e+38
        %v1324 = vsel %vm1317, %v350, -3e+38
        %v1325 = vsel %vm1317, %v351, -3e+38
        %v1326 = vsel %vm1317, %v352, -3e+38
        %v1327 = vsel %vm1317, %v353, -3e+38
        %v1328 = vsel %vm1317, %v354, -3e+38
        %v1329 = vsel %vm1317, %v355, -3e+38
        %v1330 = vsel %vm1317, %v356, -3e+38
        %v1331 = vsel %vm1317, %v357, -3e+38
        %v1332 = vsel %vm1317, %v358, -3e+38
        %v1333 = vsel %vm1317, %v359, -3e+38
        %v1334 = vsel %vm1317, %v360, -3e+38
        %v1335 = vsel %vm1317, %v361, -3e+38
        %v1336 = vsel %vm1317, %v362, -3e+38
        %v1337 = vsel %vm1317, %v363, -3e+38
        %v1338 = vsel %vm1317, %v364, -3e+38
        %v1339 = vsel %vm1317, %v365, -3e+38
        %v1340 = vsel %vm1317, %v366, -3e+38
        %v1341 = vsel %vm1317, %v367, -3e+38
        %v1342 = vsel %vm1317, %v368, -3e+38
        %v1343 = vsel %vm1317, %v369, -3e+38
        %v1344 = vsel %vm1317, %v370, -3e+38
        %v1345 = vsel %vm1317, %v371, -3e+38
        %v1346 = vsel %vm1317, %v372, -3e+38
        %v1347 = vsel %vm1317, %v373, -3e+38
        %v1348 = vsel %vm1317, %v374, -3e+38
        %v1349 = vsel %vm1317, %v375, -3e+38
        %v1350 = vsel %vm1317, %v376, -3e+38
        %v1351 = vsel %vm1317, %v377, -3e+38
        %v1352 = vsel %vm1317, %v378, -3e+38
        %v1353 = vsel %vm1317, %v379, -3e+38
        %v1354 = vsel %vm1317, %v380, -3e+38
        %v1355 = vsel %vm1317, %v381, -3e+38
        %v1356 = vsel %vm1317, %v382, -3e+38
        %v1357 = vsel %vm1317, %v383, -3e+38
        %1358 = vmax.xlane.f32.xlu0 %v1318
        %v1359 = vpop.xlane.xlu0 %1358
        %1360 = vmax.xlane.f32.xlu0 %v1319
        %v1361 = vpop.xlane.xlu0 %1360
        %1362 = vmax.xlane.f32.xlu0 %v1320
        %v1363 = vpop.xlane.xlu0 %1362
        %1364 = vmax.xlane.f32.xlu0 %v1321
        %v1365 = vpop.xlane.xlu0 %1364
        %1366 = vmax.xlane.f32.xlu0 %v1322
        %v1367 = vpop.xlane.xlu0 %1366
        %1368 = vmax.xlane.f32.xlu0 %v1323
        %v1369 = vpop.xlane.xlu0 %1368
        %1370 = vmax.xlane.f32.xlu0 %v1324
        %v1371 = vpop.xlane.xlu0 %1370
        %1372 = vmax.xlane.f32.xlu0 %v1325
        %v1373 = vpop.xlane.xlu0 %1372
        %1374 = vmax.xlane.f32.xlu0 %v1326
        %v1375 = vpop.xlane.xlu0 %1374
        %1376 = vmax.xlane.f32.xlu0 %v1327
        %v1377 = vpop.xlane.xlu0 %1376
        %1378 = vmax.xlane.f32.xlu0 %v1328
        %v1379 = vpop.xlane.xlu0 %1378
        %1380 = vmax.xlane.f32.xlu0 %v1329
        %v1381 = vpop.xlane.xlu0 %1380
        %1382 = vmax.xlane.f32.xlu0 %v1330
        %v1383 = vpop.xlane.xlu0 %1382
        %1384 = vmax.xlane.f32.xlu0 %v1331
        %v1385 = vpop.xlane.xlu0 %1384
        %1386 = vmax.xlane.f32.xlu0 %v1332
        %v1387 = vpop.xlane.xlu0 %1386
        %1388 = vmax.xlane.f32.xlu0 %v1333
        %v1389 = vpop.xlane.xlu0 %1388
        %1390 = vmax.xlane.f32.xlu0 %v1334
        %v1391 = vpop.xlane.xlu0 %1390
        %1392 = vmax.xlane.f32.xlu0 %v1335
        %v1393 = vpop.xlane.xlu0 %1392
        %1394 = vmax.xlane.f32.xlu0 %v1336
        %v1395 = vpop.xlane.xlu0 %1394
        %1396 = vmax.xlane.f32.xlu0 %v1337
        %v1397 = vpop.xlane.xlu0 %1396
        %1398 = vmax.xlane.f32.xlu0 %v1338
        %v1399 = vpop.xlane.xlu0 %1398
        %1400 = vmax.xlane.f32.xlu0 %v1339
        %v1401 = vpop.xlane.xlu0 %1400
        %1402 = vmax.xlane.f32.xlu0 %v1340
        %v1403 = vpop.xlane.xlu0 %1402
        %1404 = vmax.xlane.f32.xlu0 %v1341
        %v1405 = vpop.xlane.xlu0 %1404
        %1406 = vmax.xlane.f32.xlu0 %v1342
        %v1407 = vpop.xlane.xlu0 %1406
        %1408 = vmax.xlane.f32.xlu0 %v1343
        %v1409 = vpop.xlane.xlu0 %1408
        %1410 = vmax.xlane.f32.xlu0 %v1344
        %v1411 = vpop.xlane.xlu0 %1410
        %1412 = vmax.xlane.f32.xlu0 %v1345
        %v1413 = vpop.xlane.xlu0 %1412
        %1414 = vmax.xlane.f32.xlu0 %v1346
        %v1415 = vpop.xlane.xlu0 %1414
        %1416 = vmax.xlane.f32.xlu0 %v1347
        %v1417 = vpop.xlane.xlu0 %1416
        %1418 = vmax.xlane.f32.xlu0 %v1348
        %v1419 = vpop.xlane.xlu0 %1418
        %1420 = vmax.xlane.f32.xlu0 %v1349
        %v1421 = vpop.xlane.xlu0 %1420
        %1422 = vmax.xlane.f32.xlu0 %v1350
        %v1423 = vpop.xlane.xlu0 %1422
        %1424 = vmax.xlane.f32.xlu0 %v1351
        %v1425 = vpop.xlane.xlu0 %1424
        %1426 = vmax.xlane.f32.xlu0 %v1352
        %v1427 = vpop.xlane.xlu0 %1426
        %1428 = vmax.xlane.f32.xlu0 %v1353
        %v1429 = vpop.xlane.xlu0 %1428
        %1430 = vmax.xlane.f32.xlu0 %v1354
        %v1431 = vpop.xlane.xlu0 %1430
        %1432 = vmax.xlane.f32.xlu0 %v1355
        %v1433 = vpop.xlane.xlu0 %1432
        %1434 = vmax.xlane.f32.xlu0 %v1356
        %v1435 = vpop.xlane.xlu0 %1434
        %1436 = vmax.xlane.f32.xlu0 %v1357
        %v1437 = vpop.xlane.xlu0 %1436
        %v1438 = vsel %vm1317, -3e+38, %v344
        %v1439 = vsel %vm1317, -3e+38, %v345
        %v1440 = vsel %vm1317, -3e+38, %v346
        %v1441 = vsel %vm1317, -3e+38, %v347
        %v1442 = vsel %vm1317, -3e+38, %v348
        %v1443 = vsel %vm1317, -3e+38, %v349
        %v1444 = vsel %vm1317, -3e+38, %v350
        %v1445 = vsel %vm1317, -3e+38, %v351
        %v1446 = vsel %vm1317, -3e+38, %v352
        %v1447 = vsel %vm1317, -3e+38, %v353
        %v1448 = vsel %vm1317, -3e+38, %v354
        %v1449 = vsel %vm1317, -3e+38, %v355
        %v1450 = vsel %vm1317, -3e+38, %v356
        %v1451 = vsel %vm1317, -3e+38, %v357
        %v1452 = vsel %vm1317, -3e+38, %v358
        %v1453 = vsel %vm1317, -3e+38, %v359
        %v1454 = vsel %vm1317, -3e+38, %v360
        %v1455 = vsel %vm1317, -3e+38, %v361
        %v1456 = vsel %vm1317, -3e+38, %v362
        %v1457 = vsel %vm1317, -3e+38, %v363
        %v1458 = vsel %vm1317, -3e+38, %v364
        %v1459 = vsel %vm1317, -3e+38, %v365
        %v1460 = vsel %vm1317, -3e+38, %v366
        %v1461 = vsel %vm1317, -3e+38, %v367
        %v1462 = vsel %vm1317, -3e+38, %v368
        %v1463 = vsel %vm1317, -3e+38, %v369
        %v1464 = vsel %vm1317, -3e+38, %v370
        %v1465 = vsel %vm1317, -3e+38, %v371
        %v1466 = vsel %vm1317, -3e+38, %v372
        %v1467 = vsel %vm1317, -3e+38, %v373
        %v1468 = vsel %vm1317, -3e+38, %v374
        %v1469 = vsel %vm1317, -3e+38, %v375
        %v1470 = vsel %vm1317, -3e+38, %v376
        %v1471 = vsel %vm1317, -3e+38, %v377
        %v1472 = vsel %vm1317, -3e+38, %v378
        %v1473 = vsel %vm1317, -3e+38, %v379
        %v1474 = vsel %vm1317, -3e+38, %v380
        %v1475 = vsel %vm1317, -3e+38, %v381
        %v1476 = vsel %vm1317, -3e+38, %v382
        %v1477 = vsel %vm1317, -3e+38, %v383
        %1478 = vmax.xlane.f32.xlu0 %v1438
        %v1479 = vpop.xlane.xlu0 %1478
        %1480 = vmax.xlane.f32.xlu0 %v1439
        %v1481 = vpop.xlane.xlu0 %1480
        %1482 = vmax.xlane.f32.xlu0 %v1440
        %v1483 = vpop.xlane.xlu0 %1482
        %1484 = vmax.xlane.f32.xlu0 %v1441
        %v1485 = vpop.xlane.xlu0 %1484
        %1486 = vmax.xlane.f32.xlu0 %v1442
        %v1487 = vpop.xlane.xlu0 %1486
        %1488 = vmax.xlane.f32.xlu0 %v1443
        %v1489 = vpop.xlane.xlu0 %1488
        %1490 = vmax.xlane.f32.xlu0 %v1444
        %v1491 = vpop.xlane.xlu0 %1490
        %1492 = vmax.xlane.f32.xlu0 %v1445
        %v1493 = vpop.xlane.xlu0 %1492
        %1494 = vmax.xlane.f32.xlu0 %v1446
        %v1495 = vpop.xlane.xlu0 %1494
        %1496 = vmax.xlane.f32.xlu0 %v1447
        %v1497 = vpop.xlane.xlu0 %1496
        %1498 = vmax.xlane.f32.xlu0 %v1448
        %v1499 = vpop.xlane.xlu0 %1498
        %1500 = vmax.xlane.f32.xlu0 %v1449
        %v1501 = vpop.xlane.xlu0 %1500
        %1502 = vmax.xlane.f32.xlu0 %v1450
        %v1503 = vpop.xlane.xlu0 %1502
        %1504 = vmax.xlane.f32.xlu0 %v1451
        %v1505 = vpop.xlane.xlu0 %1504
        %1506 = vmax.xlane.f32.xlu0 %v1452
        %v1507 = vpop.xlane.xlu0 %1506
        %1508 = vmax.xlane.f32.xlu0 %v1453
        %v1509 = vpop.xlane.xlu0 %1508
        %1510 = vmax.xlane.f32.xlu0 %v1454
        %v1511 = vpop.xlane.xlu0 %1510
        %1512 = vmax.xlane.f32.xlu0 %v1455
        %v1513 = vpop.xlane.xlu0 %1512
        %1514 = vmax.xlane.f32.xlu0 %v1456
        %v1515 = vpop.xlane.xlu0 %1514
        %1516 = vmax.xlane.f32.xlu0 %v1457
        %v1517 = vpop.xlane.xlu0 %1516
        %1518 = vmax.xlane.f32.xlu0 %v1458
        %v1519 = vpop.xlane.xlu0 %1518
        %1520 = vmax.xlane.f32.xlu0 %v1459
        %v1521 = vpop.xlane.xlu0 %1520
        %1522 = vmax.xlane.f32.xlu0 %v1460
        %v1523 = vpop.xlane.xlu0 %1522
        %1524 = vmax.xlane.f32.xlu0 %v1461
        %v1525 = vpop.xlane.xlu0 %1524
        %1526 = vmax.xlane.f32.xlu0 %v1462
        %v1527 = vpop.xlane.xlu0 %1526
        %1528 = vmax.xlane.f32.xlu0 %v1463
        %v1529 = vpop.xlane.xlu0 %1528
        %1530 = vmax.xlane.f32.xlu0 %v1464
        %v1531 = vpop.xlane.xlu0 %1530
        %1532 = vmax.xlane.f32.xlu0 %v1465
        %v1533 = vpop.xlane.xlu0 %1532
        %1534 = vmax.xlane.f32.xlu0 %v1466
        %v1535 = vpop.xlane.xlu0 %1534
        %1536 = vmax.xlane.f32.xlu0 %v1467
        %v1537 = vpop.xlane.xlu0 %1536
        %1538 = vmax.xlane.f32.xlu0 %v1468
        %v1539 = vpop.xlane.xlu0 %1538
        %1540 = vmax.xlane.f32.xlu0 %v1469
        %v1541 = vpop.xlane.xlu0 %1540
        %1542 = vmax.xlane.f32.xlu0 %v1470
        %v1543 = vpop.xlane.xlu0 %1542
        %1544 = vmax.xlane.f32.xlu0 %v1471
        %v1545 = vpop.xlane.xlu0 %1544
        %1546 = vmax.xlane.f32.xlu0 %v1472
        %v1547 = vpop.xlane.xlu0 %1546
        %1548 = vmax.xlane.f32.xlu0 %v1473
        %v1549 = vpop.xlane.xlu0 %1548
        %1550 = vmax.xlane.f32.xlu0 %v1474
        %v1551 = vpop.xlane.xlu0 %1550
        %1552 = vmax.xlane.f32.xlu0 %v1475
        %v1553 = vpop.xlane.xlu0 %1552
        %1554 = vmax.xlane.f32.xlu0 %v1476
        %v1555 = vpop.xlane.xlu0 %1554
        %1556 = vmax.xlane.f32.xlu0 %v1477
        %v1557 = vpop.xlane.xlu0 %1556
        %vm1558 = vcmp.ge.f32.partialorder %v1479, %v1359
        %vm1559 = vcmp.ge.f32.partialorder %v1481, %v1361
        %vm1560 = vcmp.ge.f32.partialorder %v1483, %v1363
        %vm1561 = vcmp.ge.f32.partialorder %v1485, %v1365
        %vm1562 = vcmp.ge.f32.partialorder %v1487, %v1367
        %vm1563 = vcmp.ge.f32.partialorder %v1489, %v1369
        %vm1564 = vcmp.ge.f32.partialorder %v1491, %v1371
        %vm1565 = vcmp.ge.f32.partialorder %v1493, %v1373
        %vm1566 = vcmp.ge.f32.partialorder %v1495, %v1375
        %vm1567 = vcmp.ge.f32.partialorder %v1497, %v1377
        %vm1568 = vcmp.ge.f32.partialorder %v1499, %v1379
        %vm1569 = vcmp.ge.f32.partialorder %v1501, %v1381
        %vm1570 = vcmp.ge.f32.partialorder %v1503, %v1383
        %vm1571 = vcmp.ge.f32.partialorder %v1505, %v1385
        %vm1572 = vcmp.ge.f32.partialorder %v1507, %v1387
        %vm1573 = vcmp.ge.f32.partialorder %v1509, %v1389
        %vm1574 = vcmp.ge.f32.partialorder %v1511, %v1391
        %vm1575 = vcmp.ge.f32.partialorder %v1513, %v1393
        %vm1576 = vcmp.ge.f32.partialorder %v1515, %v1395
        %vm1577 = vcmp.ge.f32.partialorder %v1517, %v1397
        %vm1578 = vcmp.ge.f32.partialorder %v1519, %v1399
        %vm1579 = vcmp.ge.f32.partialorder %v1521, %v1401
        %vm1580 = vcmp.ge.f32.partialorder %v1523, %v1403
        %vm1581 = vcmp.ge.f32.partialorder %v1525, %v1405
        %vm1582 = vcmp.ge.f32.partialorder %v1527, %v1407
        %vm1583 = vcmp.ge.f32.partialorder %v1529, %v1409
        %vm1584 = vcmp.ge.f32.partialorder %v1531, %v1411
        %vm1585 = vcmp.ge.f32.partialorder %v1533, %v1413
        %vm1586 = vcmp.ge.f32.partialorder %v1535, %v1415
        %vm1587 = vcmp.ge.f32.partialorder %v1537, %v1417
        %vm1588 = vcmp.ge.f32.partialorder %v1539, %v1419
        %vm1589 = vcmp.ge.f32.partialorder %v1541, %v1421
        %vm1590 = vcmp.ge.f32.partialorder %v1543, %v1423
        %vm1591 = vcmp.ge.f32.partialorder %v1545, %v1425
        %vm1592 = vcmp.ge.f32.partialorder %v1547, %v1427
        %vm1593 = vcmp.ge.f32.partialorder %v1549, %v1429
        %vm1594 = vcmp.ge.f32.partialorder %v1551, %v1431
        %vm1595 = vcmp.ge.f32.partialorder %v1553, %v1433
        %vm1596 = vcmp.ge.f32.partialorder %v1555, %v1435
        %vm1597 = vcmp.ge.f32.partialorder %v1557, %v1437
        %v1598 = vsel %vm1558, 1.0, 0.0
        %v1599 = vsel %vm1559, 1.0, 0.0
        %v1600 = vsel %vm1560, 1.0, 0.0
        %v1601 = vsel %vm1561, 1.0, 0.0
        %v1602 = vsel %vm1562, 1.0, 0.0
        %v1603 = vsel %vm1563, 1.0, 0.0
        %v1604 = vsel %vm1564, 1.0, 0.0
        %v1605 = vsel %vm1565, 1.0, 0.0
        %v1606 = vsel %vm1566, 1.0, 0.0
        %v1607 = vsel %vm1567, 1.0, 0.0
        %v1608 = vsel %vm1568, 1.0, 0.0
        %v1609 = vsel %vm1569, 1.0, 0.0
        %v1610 = vsel %vm1570, 1.0, 0.0
        %v1611 = vsel %vm1571, 1.0, 0.0
        %v1612 = vsel %vm1572, 1.0, 0.0
        %v1613 = vsel %vm1573, 1.0, 0.0
        %v1614 = vsel %vm1574, 1.0, 0.0
        %v1615 = vsel %vm1575, 1.0, 0.0
        %v1616 = vsel %vm1576, 1.0, 0.0
        %v1617 = vsel %vm1577, 1.0, 0.0
        %v1618 = vsel %vm1578, 1.0, 0.0
        %v1619 = vsel %vm1579, 1.0, 0.0
        %v1620 = vsel %vm1580, 1.0, 0.0
        %v1621 = vsel %vm1581, 1.0, 0.0
        %v1622 = vsel %vm1582, 1.0, 0.0
        %v1623 = vsel %vm1583, 1.0, 0.0
        %v1624 = vsel %vm1584, 1.0, 0.0
        %v1625 = vsel %vm1585, 1.0, 0.0
        %v1626 = vsel %vm1586, 1.0, 0.0
        %v1627 = vsel %vm1587, 1.0, 0.0
        %v1628 = vsel %vm1588, 1.0, 0.0
        %v1629 = vsel %vm1589, 1.0, 0.0
        %v1630 = vsel %vm1590, 1.0, 0.0
        %v1631 = vsel %vm1591, 1.0, 0.0
        %v1632 = vsel %vm1592, 1.0, 0.0
        %v1633 = vsel %vm1593, 1.0, 0.0
        %v1634 = vsel %vm1594, 1.0, 0.0
        %v1635 = vsel %vm1595, 1.0, 0.0
        %v1636 = vsel %vm1596, 1.0, 0.0
        %v1637 = vsel %vm1597, 1.0, 0.0
        %v1678 = vlaneseq
        %v1679 = vshrl.u32 %v1678, 7
        %v1680 = vsub.s32 %v1316, %v1679
        %v1681 = vrot.slane %v1598, %v1680
        %v1682 = vadd.s32 %v1316, 4294967288
        %v1683 = vlaneseq
        %v1684 = vshrl.u32 %v1683, 7
        %v1685 = vsub.s32 %v1682, %v1684
        %v1686 = vrot.slane %v1599, %v1685
        %vm1687 = vcmask 130112
        %v1688 = vsel %vm1687, %v1686, %v1681
        %v1689 = vadd.s32 %v1316, 4294967280
        %v1690 = vlaneseq
        %v1691 = vshrl.u32 %v1690, 7
        %v1692 = vsub.s32 %v1689, %v1691
        %v1693 = vrot.slane %v1600, %v1692
        %vm1694 = vcmask 195712
        %v1695 = vsel %vm1694, %v1693, %v1688
        %v1696 = vadd.s32 %v1316, 4294967272
        %v1697 = vlaneseq
        %v1698 = vshrl.u32 %v1697, 7
        %v1699 = vsub.s32 %v1696, %v1698
        %v1700 = vrot.slane %v1601, %v1699
        %vm1701 = vcmask 261312
        %v1702 = vsel %vm1701, %v1700, %v1695
        %v1703 = vadd.s32 %v1316, 4294967264
        %v1704 = vlaneseq
        %v1705 = vshrl.u32 %v1704, 7
        %v1706 = vsub.s32 %v1703, %v1705
        %v1707 = vrot.slane %v1602, %v1706
        %vm1708 = vcmask 326912
        %v1709 = vsel %vm1708, %v1707, %v1702
        %v1710 = vadd.s32 %v1316, 4294967256
        %v1711 = vlaneseq
        %v1712 = vshrl.u32 %v1711, 7
        %v1713 = vsub.s32 %v1710, %v1712
        %v1714 = vrot.slane %v1603, %v1713
        %vm1715 = vcmask 392512
        %v1716 = vsel %vm1715, %v1714, %v1709
        %v1717 = vadd.s32 %v1316, 4294967248
        %v1718 = vlaneseq
        %v1719 = vshrl.u32 %v1718, 7
        %v1720 = vsub.s32 %v1717, %v1719
        %v1721 = vrot.slane %v1604, %v1720
        %vm1722 = vcmask 458112
        %v1723 = vsel %vm1722, %v1721, %v1716
        %v1724 = vadd.s32 %v1316, 4294967240
        %v1725 = vlaneseq
        %v1726 = vshrl.u32 %v1725, 7
        %v1727 = vsub.s32 %v1724, %v1726
        %v1728 = vrot.slane %v1605, %v1727
        %vm1729 = vcmask 523712
        %v1730 = vsel %vm1729, %v1728, %v1723
        %v1731 = vadd.s32 %v1316, 4294967232
        %v1732 = vlaneseq
        %v1733 = vshrl.u32 %v1732, 7
        %v1734 = vsub.s32 %v1731, %v1733
        %v1735 = vrot.slane %v1606, %v1734
        %vm1736 = vcmask 589312
        %v1737 = vsel %vm1736, %v1735, %v1730
        %v1738 = vadd.s32 %v1316, 4294967224
        %v1739 = vlaneseq
        %v1740 = vshrl.u32 %v1739, 7
        %v1741 = vsub.s32 %v1738, %v1740
        %v1742 = vrot.slane %v1607, %v1741
        %vm1743 = vcmask 654912
        %v1744 = vsel %vm1743, %v1742, %v1737
        %v1745 = vadd.s32 %v1316, 4294967216
        %v1746 = vlaneseq
        %v1747 = vshrl.u32 %v1746, 7
        %v1748 = vsub.s32 %v1745, %v1747
        %v1749 = vrot.slane %v1608, %v1748
        %vm1750 = vcmask 720512
        %v1751 = vsel %vm1750, %v1749, %v1744
        %v1752 = vadd.s32 %v1316, 4294967208
        %v1753 = vlaneseq
        %v1754 = vshrl.u32 %v1753, 7
        %v1755 = vsub.s32 %v1752, %v1754
        %v1756 = vrot.slane %v1609, %v1755
        %vm1757 = vcmask 786112
        %v1758 = vsel %vm1757, %v1756, %v1751
        %v1759 = vadd.s32 %v1316, 4294967200
        %v1760 = vlaneseq
        %v1761 = vshrl.u32 %v1760, 7
        %v1762 = vsub.s32 %v1759, %v1761
        %v1763 = vrot.slane %v1610, %v1762
        %vm1764 = vcmask 851712
        %v1765 = vsel %vm1764, %v1763, %v1758
        %v1766 = vadd.s32 %v1316, 4294967192
        %v1767 = vlaneseq
        %v1768 = vshrl.u32 %v1767, 7
        %v1769 = vsub.s32 %v1766, %v1768
        %v1770 = vrot.slane %v1611, %v1769
        %vm1771 = vcmask 917312
        %v1772 = vsel %vm1771, %v1770, %v1765
        %v1773 = vadd.s32 %v1316, 4294967184
        %v1774 = vlaneseq
        %v1775 = vshrl.u32 %v1774, 7
        %v1776 = vsub.s32 %v1773, %v1775
        %v1777 = vrot.slane %v1612, %v1776
        %vm1778 = vcmask 982912
        %v1779 = vsel %vm1778, %v1777, %v1772
        %v1780 = vadd.s32 %v1316, 4294967176
        %v1781 = vlaneseq
        %v1782 = vshrl.u32 %v1781, 7
        %v1783 = vsub.s32 %v1780, %v1782
        %v1784 = vrot.slane %v1613, %v1783
        %vm1785 = vcmask 1048512
        %v1786 = vsel %vm1785, %v1784, %v1779
        %v1787 = vlaneseq
        %v1788 = vshrl.u32 %v1787, 7
        %v1789 = vsub.s32 %v1316, %v1788
        %v1790 = vrot.slane %v1614, %v1789
        %v1791 = vlaneseq
        %v1792 = vshrl.u32 %v1791, 7
        %v1793 = vsub.s32 %v1682, %v1792
        %v1794 = vrot.slane %v1615, %v1793
        %v1795 = vsel %vm1687, %v1794, %v1790
        %v1796 = vlaneseq
        %v1797 = vshrl.u32 %v1796, 7
        %v1798 = vsub.s32 %v1689, %v1797
        %v1799 = vrot.slane %v1616, %v1798
        %v1800 = vsel %vm1694, %v1799, %v1795
        %v1801 = vlaneseq
        %v1802 = vshrl.u32 %v1801, 7
        %v1803 = vsub.s32 %v1696, %v1802
        %v1804 = vrot.slane %v1617, %v1803
        %v1805 = vsel %vm1701, %v1804, %v1800
        %v1806 = vlaneseq
        %v1807 = vshrl.u32 %v1806, 7
        %v1808 = vsub.s32 %v1316, %v1807
        %v1809 = vrot.slane %v1618, %v1808
        %v1810 = vlaneseq
        %v1811 = vshrl.u32 %v1810, 7
        %v1812 = vsub.s32 %v1682, %v1811
        %v1813 = vrot.slane %v1619, %v1812
        %v1814 = vsel %vm1687, %v1813, %v1809
        %v1815 = vlaneseq
        %v1816 = vshrl.u32 %v1815, 7
        %v1817 = vsub.s32 %v1689, %v1816
        %v1818 = vrot.slane %v1620, %v1817
        %v1819 = vsel %vm1694, %v1818, %v1814
        %v1820 = vlaneseq
        %v1821 = vshrl.u32 %v1820, 7
        %v1822 = vsub.s32 %v1696, %v1821
        %v1823 = vrot.slane %v1621, %v1822
        %v1824 = vsel %vm1701, %v1823, %v1819
        %v1825 = vlaneseq
        %v1826 = vshrl.u32 %v1825, 7
        %v1827 = vsub.s32 %v1703, %v1826
        %v1828 = vrot.slane %v1622, %v1827
        %v1829 = vsel %vm1708, %v1828, %v1824
        %v1830 = vlaneseq
        %v1831 = vshrl.u32 %v1830, 7
        %v1832 = vsub.s32 %v1710, %v1831
        %v1833 = vrot.slane %v1623, %v1832
        %v1834 = vsel %vm1715, %v1833, %v1829
        %v1835 = vlaneseq
        %v1836 = vshrl.u32 %v1835, 7
        %v1837 = vsub.s32 %v1717, %v1836
        %v1838 = vrot.slane %v1624, %v1837
        %v1839 = vsel %vm1722, %v1838, %v1834
        %v1840 = vlaneseq
        %v1841 = vshrl.u32 %v1840, 7
        %v1842 = vsub.s32 %v1724, %v1841
        %v1843 = vrot.slane %v1625, %v1842
        %v1844 = vsel %vm1729, %v1843, %v1839
        %v1845 = vlaneseq
        %v1846 = vshrl.u32 %v1845, 7
        %v1847 = vsub.s32 %v1731, %v1846
        %v1848 = vrot.slane %v1626, %v1847
        %v1849 = vsel %vm1736, %v1848, %v1844
        %v1850 = vlaneseq
        %v1851 = vshrl.u32 %v1850, 7
        %v1852 = vsub.s32 %v1738, %v1851
        %v1853 = vrot.slane %v1627, %v1852
        %v1854 = vsel %vm1743, %v1853, %v1849
        %v1855 = vlaneseq
        %v1856 = vshrl.u32 %v1855, 7
        %v1857 = vsub.s32 %v1745, %v1856
        %v1858 = vrot.slane %v1628, %v1857
        %v1859 = vsel %vm1750, %v1858, %v1854
        %v1860 = vlaneseq
        %v1861 = vshrl.u32 %v1860, 7
        %v1862 = vsub.s32 %v1752, %v1861
        %v1863 = vrot.slane %v1629, %v1862
        %v1864 = vsel %vm1757, %v1863, %v1859
        %v1865 = vlaneseq
        %v1866 = vshrl.u32 %v1865, 7
        %v1867 = vsub.s32 %v1759, %v1866
        %v1868 = vrot.slane %v1630, %v1867
        %v1869 = vsel %vm1764, %v1868, %v1864
        %v1870 = vlaneseq
        %v1871 = vshrl.u32 %v1870, 7
        %v1872 = vsub.s32 %v1766, %v1871
        %v1873 = vrot.slane %v1631, %v1872
        %v1874 = vsel %vm1771, %v1873, %v1869
        %v1875 = vlaneseq
        %v1876 = vshrl.u32 %v1875, 7
        %v1877 = vsub.s32 %v1773, %v1876
        %v1878 = vrot.slane %v1632, %v1877
        %v1879 = vsel %vm1778, %v1878, %v1874
        %v1880 = vlaneseq
        %v1881 = vshrl.u32 %v1880, 7
        %v1882 = vsub.s32 %v1780, %v1881
        %v1883 = vrot.slane %v1633, %v1882
        %v1884 = vsel %vm1785, %v1883, %v1879
        %v1885 = vlaneseq
        %v1886 = vshrl.u32 %v1885, 7
        %v1887 = vsub.s32 %v1316, %v1886
        %v1888 = vrot.slane %v1634, %v1887
        %v1889 = vlaneseq
        %v1890 = vshrl.u32 %v1889, 7
        %v1891 = vsub.s32 %v1682, %v1890
        %v1892 = vrot.slane %v1635, %v1891
        %v1893 = vsel %vm1687, %v1892, %v1888
        %v1894 = vlaneseq
        %v1895 = vshrl.u32 %v1894, 7
        %v1896 = vsub.s32 %v1689, %v1895
        %v1897 = vrot.slane %v1636, %v1896
        %v1898 = vsel %vm1694, %v1897, %v1893
        %v1899 = vlaneseq
        %v1900 = vshrl.u32 %v1899, 7
        %v1901 = vsub.s32 %v1696, %v1900
        %v1902 = vrot.slane %v1637, %v1901
        %v1903 = vsel %vm1701, %v1902, %v1898
        %vm1904 = vcmask 1041409
        %v1905 = vsel %vm1904, %v1884, %v1786
        %v1906 = vsel %vm1904, %v1903, %v1805
        %vm1909 = vcmask 1041408
        %v1910 = vsel %vm1909, %v1905, 0.0
        %vm1911 = vcmask 254976
        %v1912 = vsel %vm1911, %v1906, 0.0
        %v1913 = vadd.f32 %v1910, %v1912
        %1914 = vadd.xlane.f32.xlu0 %v1913
        %v1915 = vpop.xlane.xlu0 %1914
        %1916 = vst [vmem:[%s343] sm:$0x3] %v1915
        %p1917 = scmp.lt.s32.totalorder %s14, 1
        %s1918 = scalar_select %p1917, %s14, 1
        %s1919 = scalar_lea.vmem %s1, %s1918
        %p1920 = scmp.lt.s32.totalorder %s14, 1
        %s1921 = scalar_select %p1920, %s14, 1
        %s1922 = smul.addr %s1921, 2
        %s1923 = scalar_lea.vmem %s2, %s1922
        // Predicated region
        $region63: #{set_criterion_forward.1} parent=57 // pred_check
          %p1924 = pneg %p58
        $region64: #{set_criterion_forward.1} parent=57 // pred_check_branch
          %1926 = sbr.rel (%p1924) target = $region66
        $region65: #{set_criterion_forward.1} parent=57 // pred_region
          _
        $region66: #{set_criterion_forward.1} parent=57 // pred_fallthru
          _
        // Predicated region
        $region67: #{set_criterion_forward.1} parent=57 // pred_check
          %p1927 = pneg %p84
        $region68: #{set_criterion_forward.1} parent=57 // pred_check_branch
          %1929 = sbr.rel (%p1927) target = $region70
        $region69: #{set_criterion_forward.1} parent=57 // pred_region
          _
        $region70: #{set_criterion_forward.1} parent=57 // pred_fallthru
          _
      $region58: #{set_criterion_forward.1} parent=5 // pred_fallthru
        _
      %p1930 = scmp.le.s32.totalorder 2, %s9
      // Predicated region
      $region71: #{set_criterion_forward.1} parent=5 // pred_check
        %p1931 = pneg %p1930
      $region72: #{set_criterion_forward.1} parent=5 // pred_check_branch
        %1933 = sbr.rel (%p1931) target = $region74
      $region73: #{set_criterion_forward.1} parent=5 // pred_region
        %s1934 = ssub.s32 %s9, 2
        // Predicated region
        $region75: #{set_criterion_forward.1} parent=73 // pred_check
          %p1935 = pneg %p64
        $region76: #{set_criterion_forward.1} parent=73 // pred_check_branch
          %1937 = sbr.rel (%p1935) target = $region78
        $region77: #{set_criterion_forward.1} parent=73 // pred_region
          %p1938 = scmp.lt.s32.totalorder %s15, 1
          %s1939 = scalar_select %p1938, %s15, 1
          %s1940 = scalar_lea.vmem %s1, %s1939
        $region78: #{set_criterion_forward.1} parent=73 // pred_fallthru
          _
        // Predicated region
        $region79: #{set_criterion_forward.1} parent=73 // pred_check
          %p1941 = pneg %p90
        $region80: #{set_criterion_forward.1} parent=73 // pred_check_branch
          %1943 = sbr.rel (%p1941) target = $region82
        $region81: #{set_criterion_forward.1} parent=73 // pred_region
          %p1944 = scmp.lt.s32.totalorder %s15, 1
          %s1945 = scalar_select %p1944, %s15, 1
          %s1946 = smul.addr %s1945, 2
          %s1947 = scalar_lea.vmem %s2, %s1946
        $region82: #{set_criterion_forward.1} parent=73 // pred_fallthru
          _
      $region74: #{set_criterion_forward.1} parent=5 // pred_fallthru
        _
    $region6: #{set_criterion_forward.1} parent=1 // loop_footer
      %s13 = sadd.s32 1, %s9
    $region7: #{set_criterion_forward.1} parent=1 // loop_footer_branch
      %8 = sbr.rel target = $region3
    $region8: #{set_criterion_forward.1} parent=1 // loop_exit
      _

</llo_original>
